<compile_context>
chip_gen: v7x
topology: tpu7x:2x2x1
jax: 0.10.0
libtpu: 0.0.40
codegen_flags: <defaults>
</compile_context>

<pallas_src>
import functools

import jax
import jax.numpy as jnp
from jax.experimental import pallas as pl
from jax.experimental.pallas import tpu as pltpu


# ----------------------------------------------------------------------------
# Fused kernel: input projection + L residual layers + output projection
# ----------------------------------------------------------------------------
def _fused_kernel(n_layers, maxd,
                  dil_ref,                                    # scalar prefetch: (L,) int32 in SMEM
                  audio_ref, win_ref, bin_ref, dproj_ref,
                  wdg_ref, bdg_ref, wdf_ref, bdf_ref,
                  wres_ref, bres_ref, wskip_ref, bskip_ref,
                  wout_ref, bout_ref,
                  out_ref,
                  x_scr, skip_scr, ypad_scr):
    l = pl.program_id(1)
    T, C = x_scr.shape

    # ---- l == 0: fused input_projection + lif_input, init VMEM accumulators ----
    @pl.when(l == 0)
    def _():
        a = audio_ref[0]                                      # (T, 1)
        x0 = a * win_ref[...] + bin_ref[...]                  # Conv1d(1, C, 1), broadcast over lanes
        x_scr[...] = (x0 > 0.5).astype(jnp.float32)           # lif_input (single LIF step)
        skip_scr[...] = jnp.zeros_like(skip_scr)
        # zero the dilation halo rows once; the body only ever writes rows [maxd, maxd+T)
        ypad_scr[0:maxd, :] = jnp.zeros((maxd, C), jnp.float32)
        ypad_scr[maxd + T:, :] = jnp.zeros((maxd, C), jnp.float32)

    d = dil_ref[l]                                            # this layer's dilation (dynamic)

    x = x_scr[...]                                            # (T, C) residual stream (f32)
    y = x + dproj_ref[l, 0]                                   # + diffusion projection (1, C)

    # dilated_conv: Conv1d(C, 2C, k=3, dilation=d, padding=d) ('same'), split gate/filter.
    # Shifted taps come from a zero-padded f32 VMEM scratch via dynamic sublane slices
    # (halo rows are zero => no masking needed); each tap is cast to bf16 and fed to the
    # MXU with f32 accumulation.  Per-tap accumulation avoids the lane-misaligned (T,3C)
    # concat temporary.
    ypad_scr[maxd:maxd + T, :] = y
    y_c = y.astype(jnp.bfloat16)                              # tap k = 1 (center)
    y_m = ypad_scr[pl.ds(maxd - d, T), :].astype(jnp.bfloat16)  # tap k = 0 : y[t - d]
    y_p = ypad_scr[pl.ds(maxd + d, T), :].astype(jnp.bfloat16)  # tap k = 2 : y[t + d]

    w_g = wdg_ref[l]                                          # (3, C, C) bf16, VMEM resident
    w_f = wdf_ref[l]                                          # (3, C, C) bf16
    gate = (jnp.dot(y_m, w_g[0], preferred_element_type=jnp.float32)
            + jnp.dot(y_c, w_g[1], preferred_element_type=jnp.float32)
            + jnp.dot(y_p, w_g[2], preferred_element_type=jnp.float32)
            + bdg_ref[l])                                     # (T, C)
    filt = (jnp.dot(y_m, w_f[0], preferred_element_type=jnp.float32)
            + jnp.dot(y_c, w_f[1], preferred_element_type=jnp.float32)
            + jnp.dot(y_p, w_f[2], preferred_element_type=jnp.float32)
            + bdf_ref[l])                                     # (T, C)

    z = jax.nn.sigmoid(gate) * jnp.tanh(filt)                 # f32 gating (kept f32 for fidelity)
    spk = (z > 0.5).astype(jnp.bfloat16)                      # lif_conv; 0/1 exact in bf16

    res = jnp.dot(spk, wres_ref[l],
                  preferred_element_type=jnp.float32) + bres_ref[l]       # res_out (1x1)
    skp = jnp.dot(spk, wskip_ref[l],
                  preferred_element_type=jnp.float32) + bskip_ref[l]      # skip_out (1x1)

    x_scr[...] = x + res
    skip_scr[...] = skip_scr[...] + (skp > 0.5).astype(jnp.float32)       # lif_skip + running sum

    # ---- l == L-1: mean over layers -> ReLU -> Conv1d(C, 1, 1), lane-dense store ----
    @pl.when(l == n_layers - 1)
    def _():
        s = jnp.maximum(skip_scr[...] * (1.0 / n_layers), 0.0)            # (T, C)
        o = jax.lax.dot_general(wout_ref[...], s,
                                dimension_numbers=(((1,), (1,)), ((), ())),
                                preferred_element_type=jnp.float32)       # (1, T), T on lanes
        out_ref[0] = o + bout_ref[...]


# ----------------------------------------------------------------------------
# Parameters (deterministic, synthetic — mirrors shapes of the PyTorch module,
# stacked along a leading layer axis L for the fused kernel)
# ----------------------------------------------------------------------------
def init_params(key, C, n_layers):
    ks = iter(jax.random.split(key, 12))

    def kaiming(k, shape, fan_in):
        # kaiming_normal_(a=1.0, mode='fan_in', leaky_relu) -> gain 1, std = 1/sqrt(fan_in)
        return jax.random.normal(k, shape, jnp.float32) / jnp.sqrt(float(fan_in))

    L = n_layers
    # Conv1d(C, 2C, 3) stored as (L, k, in, out); k ordering matches PyTorch cross-correlation
    wdil = kaiming(next(ks), (L, 3, C, 2 * C), 3 * C)

    params = {
        # input_projection: Conv1d(1, C, 1)
        "w_in": kaiming(next(ks), (1, C), 1),
        "b_in": jnp.zeros((1, C), jnp.float32),
        # diffusion_embedding: Linear(1, C) -> SiLU -> Linear(C, C)   (plain-JAX glue)
        "w_e1": kaiming(next(ks), (1, C), 1),
        "b_e1": jnp.zeros((C,), jnp.float32),
        "w_e2": kaiming(next(ks), (C, C), C),
        "b_e2": jnp.zeros((C,), jnp.float32),
        # per-layer diffusion_projection: Linear(C, C) stored (in, out)
        "wdp": kaiming(next(ks), (L, C, C), C),
        "bdp": jnp.zeros((L, C), jnp.float32),
        # dilated conv split into gate / filter halves, per-tap (L, 3, C, C), bf16 for the MXU
        # (torch chunk: first half of the 2C outputs = gate, second half = filter)
        "wdg": wdil[:, :, :, :C].astype(jnp.bfloat16),
        "bdg": jnp.zeros((L, 1, C), jnp.float32),
        "wdf": wdil[:, :, :, C:].astype(jnp.bfloat16),
        "bdf": jnp.zeros((L, 1, C), jnp.float32),
        # res_out / skip_out: Conv1d(C, C, 1).  Stored bf16 (LHS spk is exactly 0/1).
        "wres":  kaiming(next(ks), (L, C, C), C).astype(jnp.bfloat16),
        "bres":  jnp.zeros((L, 1, C), jnp.float32),
        "wskip": kaiming(next(ks), (L, C, C), C).astype(jnp.bfloat16),
        "bskip": jnp.zeros((L, 1, C), jnp.float32),
        # output_projection: ReLU -> Conv1d(C, 1, 1) as a (1, C) row
        "w_out": kaiming(next(ks), (1, C), C),
        "b_out": jnp.zeros((1, 1), jnp.float32),
    }
    # NOTE: conditioner_projection exists in __init__ but is unused in forward -> omitted.
    return params


# ----------------------------------------------------------------------------
# Full forward pass
# ----------------------------------------------------------------------------
def diffwave_forward(params, audio, diffusion_step, dilation_cycle_length):
    B, T = audio.shape
    C = params["w_in"].shape[1]
    L = params["wdg"].shape[0]
    maxd = 2 ** (dilation_cycle_length - 1)

    # diffusion embedding MLP (tiny — plain JAX glue)
    dstep = diffusion_step.reshape(B, 1).astype(jnp.float32)
    h = dstep @ params["w_e1"] + params["b_e1"]
    h = h * jax.nn.sigmoid(h)                                 # SiLU
    demb = h @ params["w_e2"] + params["b_e2"]                # (B, C)

    # per-layer diffusion projection precomputed here (avoids M=1 matmuls in-kernel);
    # layer-major so the kernel indexes the leading axis with l: (L, B, 1, C)
    dproj = jnp.einsum("bc,lcd->lbd", demb, params["wdp"]) + params["bdp"][:, None, :]
    dproj = dproj[:, :, None, :]                              # (L, B, 1, C)

    dilations = jnp.asarray(
        [2 ** (i % dilation_cycle_length) for i in range(L)], dtype=jnp.int32)

    # Full-array BlockSpecs (constant index_maps) keep all layer-stacked weights VMEM
    # resident across the whole grid; only `audio`, `dproj` and the output change per b.
    wfull = lambda arr: pl.BlockSpec(arr.shape, lambda b, l, dil: (0,) * arr.ndim)

    out = pl.pallas_call(
        functools.partial(_fused_kernel, L, maxd),
        out_shape=jax.ShapeDtypeStruct((B, 1, T), jnp.float32),
        grid_spec=pltpu.PrefetchScalarGridSpec(
            num_scalar_prefetch=1,
            grid=(B, L),
            in_specs=[
                pl.BlockSpec((1, T, 1), lambda b, l, dil: (b, 0, 0)),        # audio
                wfull(params["w_in"]),                                       # w_in
                wfull(params["b_in"]),                                       # b_in
                pl.BlockSpec((L, 1, 1, C), lambda b, l, dil: (0, b, 0, 0)),  # dproj (per batch)
                wfull(params["wdg"]),                                        # wdg (L,3,C,C) bf16
                wfull(params["bdg"]),                                        # bdg
                wfull(params["wdf"]),                                        # wdf (L,3,C,C) bf16
                wfull(params["bdf"]),                                        # bdf
                wfull(params["wres"]),                                       # wres (bf16)
                wfull(params["bres"]),                                       # bres
                wfull(params["wskip"]),                                      # wskip (bf16)
                wfull(params["bskip"]),                                      # bskip
                wfull(params["w_out"]),                                      # w_out
                wfull(params["b_out"]),                                      # b_out
            ],
            out_specs=pl.BlockSpec((1, 1, T), lambda b, l, dil: (b, 0, 0)),
            scratch_shapes=[
                pltpu.VMEM((T, C), jnp.float32),              # x (residual stream)
                pltpu.VMEM((T, C), jnp.float32),              # running skip sum
                pltpu.VMEM((T + 2 * maxd, C), jnp.float32),   # zero-padded y for dilated taps
            ]),
        compiler_params=pltpu.CompilerParams(
            dimension_semantics=("parallel", "arbitrary"),
            vmem_limit_bytes=64 * 1024 * 1024),
    )(dilations, audio.reshape(B, T, 1),
      params["w_in"], params["b_in"], dproj,
      params["wdg"], params["bdg"], params["wdf"], params["bdf"],
      params["wres"], params["bres"], params["wskip"], params["bskip"],
      params["w_out"], params["b_out"])

    return out                                                # (B, 1, T) — PyTorch NCL output


# ----------------------------------------------------------------------------
if __name__ == "__main__":
    B, T, C = 2, 64, 32               # batch, audio length, residual_channels
    n_layers, dil_cycle = 4, 2        # residual_layers, dilation_cycle_length

    key = jax.random.PRNGKey(0)
    kp, ka, kd = jax.random.split(key, 3)
    params = init_params(kp, C, n_layers)

    audio = jax.random.normal(ka, (B, T), jnp.float32)
    diffusion_step = jax.random.randint(kd, (B,), 0, 50).astype(jnp.float32)

    fwd = jax.jit(functools.partial(diffwave_forward,
                                    dilation_cycle_length=dil_cycle))
    out = fwd(params, audio, diffusion_step)
    out = jax.block_until_ready(out)
    assert out.shape == (B, 1, T) and out.dtype == jnp.float32
    print("KERNEL_OK")
</pallas_src>

<mosaic_0001>
module attributes {stable_mosaic.version = 11 : i64} {
  func.func @_fused_kernel(%arg0: i32, %arg1: i32, %arg2: memref<4xi32, #tpu.memory_space<smem>>, %arg3: memref<1x64x1xf32, #tpu.memory_space<vmem>>, %arg4: memref<1x32xf32, #tpu.memory_space<vmem>>, %arg5: memref<1x32xf32, #tpu.memory_space<vmem>>, %arg6: memref<4x1x1x32xf32, #tpu.memory_space<vmem>>, %arg7: memref<4x3x32x32xbf16, #tpu.memory_space<vmem>>, %arg8: memref<4x1x32xf32, #tpu.memory_space<vmem>>, %arg9: memref<4x3x32x32xbf16, #tpu.memory_space<vmem>>, %arg10: memref<4x1x32xf32, #tpu.memory_space<vmem>>, %arg11: memref<4x32x32xbf16, #tpu.memory_space<vmem>>, %arg12: memref<4x1x32xf32, #tpu.memory_space<vmem>>, %arg13: memref<4x32x32xbf16, #tpu.memory_space<vmem>>, %arg14: memref<4x1x32xf32, #tpu.memory_space<vmem>>, %arg15: memref<1x32xf32, #tpu.memory_space<vmem>>, %arg16: memref<1x1xf32, #tpu.memory_space<vmem>>, %arg17: memref<1x1x64xf32, #tpu.memory_space<vmem>>, %arg18: memref<64x32xf32, #tpu.memory_space<vmem>>, %arg19: memref<64x32xf32, #tpu.memory_space<vmem>>, %arg20: memref<68x32xf32, #tpu.memory_space<vmem>>) attributes {dimension_semantics = [#tpu.dimension_semantics<parallel>, #tpu.dimension_semantics<arbitrary>], iteration_bounds = array<i64: 2, 4>, scalar_prefetch = 1 : i64, scratch_operands = 3 : i64, tpu.core_type = #tpu.core_type<tc>, window_params = [{transform_indices = @transform_0, window_bounds = array<i64: 1, 64, 1>}, {pipeline_mode = #tpu.pipeline_mode<synchronous>, transform_indices = @transform_1, window_bounds = array<i64: 1, 32>}, {pipeline_mode = #tpu.pipeline_mode<synchronous>, transform_indices = @transform_2, window_bounds = array<i64: 1, 32>}, {transform_indices = @transform_3, window_bounds = array<i64: 4, 1, 1, 32>}, {pipeline_mode = #tpu.pipeline_mode<synchronous>, transform_indices = @transform_4, window_bounds = array<i64: 4, 3, 32, 32>}, {pipeline_mode = #tpu.pipeline_mode<synchronous>, transform_indices = @transform_5, window_bounds = array<i64: 4, 1, 32>}, {pipeline_mode = #tpu.pipeline_mode<synchronous>, transform_indices = @transform_6, window_bounds = array<i64: 4, 3, 32, 32>}, {pipeline_mode = #tpu.pipeline_mode<synchronous>, transform_indices = @transform_7, window_bounds = array<i64: 4, 1, 32>}, {pipeline_mode = #tpu.pipeline_mode<synchronous>, transform_indices = @transform_8, window_bounds = array<i64: 4, 32, 32>}, {pipeline_mode = #tpu.pipeline_mode<synchronous>, transform_indices = @transform_9, window_bounds = array<i64: 4, 1, 32>}, {pipeline_mode = #tpu.pipeline_mode<synchronous>, transform_indices = @transform_10, window_bounds = array<i64: 4, 32, 32>}, {pipeline_mode = #tpu.pipeline_mode<synchronous>, transform_indices = @transform_11, window_bounds = array<i64: 4, 1, 32>}, {pipeline_mode = #tpu.pipeline_mode<synchronous>, transform_indices = @transform_12, window_bounds = array<i64: 1, 32>}, {pipeline_mode = #tpu.pipeline_mode<synchronous>, transform_indices = @transform_13, window_bounds = array<i64: 1, 1>}, {transform_indices = @transform_14, window_bounds = array<i64: 1, 1, 64>}]} {
    %c0_i32 = arith.constant 0 : i32
    %0 = arith.cmpi eq, %arg1, %c0_i32 : i32
    %1 = arith.extui %0 : i1 to i32
    %c0_i32_0 = arith.constant 0 : i32
    %2 = arith.cmpi ne, %1, %c0_i32_0 : i32
    scf.if %2 {
      %c0_44 = arith.constant 0 : index
      %c0_45 = arith.constant 0 : index
      %c0_46 = arith.constant 0 : index
      %101 = vector.load %arg3[%c0_44, %c0_45, %c0_46] : memref<1x64x1xf32, #tpu.memory_space<vmem>>, vector<1x64x1xf32>
      %102 = vector.shape_cast %101 : vector<1x64x1xf32> to vector<64x1xf32>
      %c0_47 = arith.constant 0 : index
      %c0_48 = arith.constant 0 : index
      %103 = vector.load %arg4[%c0_47, %c0_48] : memref<1x32xf32, #tpu.memory_space<vmem>>, vector<1x32xf32>
      %104 = vector.broadcast %102 : vector<64x1xf32> to vector<64x32xf32>
      %105 = vector.broadcast %103 : vector<1x32xf32> to vector<64x32xf32>
      %106 = arith.mulf %104, %105 : vector<64x32xf32>
      %c0_49 = arith.constant 0 : index
      %c0_50 = arith.constant 0 : index
      %107 = vector.load %arg5[%c0_49, %c0_50] : memref<1x32xf32, #tpu.memory_space<vmem>>, vector<1x32xf32>
      %108 = vector.broadcast %107 : vector<1x32xf32> to vector<64x32xf32>
      %109 = arith.addf %106, %108 : vector<64x32xf32>
      %cst_51 = arith.constant 5.000000e-01 : f32
      %110 = vector.broadcast %cst_51 : f32 to vector<64x32xf32>
      %111 = arith.cmpf ogt, %109, %110 : vector<64x32xf32>
      %112 = arith.extui %111 : vector<64x32xi1> to vector<64x32xi32>
      %113 = arith.sitofp %112 : vector<64x32xi32> to vector<64x32xf32>
      %c0_52 = arith.constant 0 : index
      %c0_53 = arith.constant 0 : index
      %114 = vector.load %arg18[%c0_52, %c0_53] : memref<64x32xf32, #tpu.memory_space<vmem>>, vector<64x32xf32>
      tpu.vector_store %arg18[%c0_52, %c0_53], %113 {strides = array<i32>} : memref<64x32xf32, #tpu.memory_space<vmem>>, vector<64x32xf32>,
      %cst_54 = arith.constant 0.000000e+00 : f32
      %115 = vector.broadcast %cst_54 : f32 to vector<64x32xf32>
      %c0_55 = arith.constant 0 : index
      %c0_56 = arith.constant 0 : index
      %116 = vector.load %arg19[%c0_55, %c0_56] : memref<64x32xf32, #tpu.memory_space<vmem>>, vector<64x32xf32>
      tpu.vector_store %arg19[%c0_55, %c0_56], %115 {strides = array<i32>} : memref<64x32xf32, #tpu.memory_space<vmem>>, vector<64x32xf32>,
      %cst_57 = arith.constant 0.000000e+00 : f32
      %117 = vector.broadcast %cst_57 : f32 to vector<2x32xf32>
      %c0_58 = arith.constant 0 : index
      %c0_59 = arith.constant 0 : index
      %118 = vector.load %arg20[%c0_58, %c0_59] : memref<68x32xf32, #tpu.memory_space<vmem>>, vector<2x32xf32>
      tpu.vector_store %arg20[%c0_58, %c0_59], %117 {strides = array<i32>} : memref<68x32xf32, #tpu.memory_space<vmem>>, vector<2x32xf32>,
      %cst_60 = arith.constant 0.000000e+00 : f32
      %119 = vector.broadcast %cst_60 : f32 to vector<2x32xf32>
      %c66 = arith.constant 66 : index
      %c0_61 = arith.constant 0 : index
      %120 = vector.load %arg20[%c66, %c0_61] : memref<68x32xf32, #tpu.memory_space<vmem>>, vector<2x32xf32>
      tpu.vector_store %arg20[%c66, %c0_61], %119 {strides = array<i32>} : memref<68x32xf32, #tpu.memory_space<vmem>>, vector<2x32xf32>,
    } else {
    }
    %3 = arith.index_cast %arg1 : i32 to index
    %4 = memref.load %arg2[%3] : memref<4xi32, #tpu.memory_space<smem>>
    %c0 = arith.constant 0 : index
    %c0_1 = arith.constant 0 : index
    %5 = vector.load %arg18[%c0, %c0_1] : memref<64x32xf32, #tpu.memory_space<vmem>>, vector<64x32xf32>
    %6 = arith.index_cast %arg1 : i32 to index
    %c0_2 = arith.constant 0 : index
    %c0_3 = arith.constant 0 : index
    %c0_4 = arith.constant 0 : index
    %7 = vector.load %arg6[%6, %c0_2, %c0_3, %c0_4] : memref<4x1x1x32xf32, #tpu.memory_space<vmem>>, vector<1x1x1x32xf32>
    %8 = vector.shape_cast %7 : vector<1x1x1x32xf32> to vector<1x32xf32>
    %9 = vector.broadcast %8 : vector<1x32xf32> to vector<64x32xf32>
    %10 = arith.addf %5, %9 : vector<64x32xf32>
    %c2 = arith.constant 2 : index
    %c0_5 = arith.constant 0 : index
    %11 = vector.load %arg20[%c2, %c0_5] : memref<68x32xf32, #tpu.memory_space<vmem>>, vector<64x32xf32>
    tpu.vector_store %arg20[%c2, %c0_5], %10 {strides = array<i32>} : memref<68x32xf32, #tpu.memory_space<vmem>>, vector<64x32xf32>,
    %12 = arith.truncf %10 : vector<64x32xf32> to vector<64x32xbf16>
    %c2_i32 = arith.constant 2 : i32
    %13 = arith.subi %c2_i32, %4 : i32
    %14 = arith.index_cast %13 : i32 to index
    %c0_6 = arith.constant 0 : index
    %15 = vector.load %arg20[%14, %c0_6] : memref<68x32xf32, #tpu.memory_space<vmem>>, vector<64x32xf32>
    %16 = arith.truncf %15 : vector<64x32xf32> to vector<64x32xbf16>
    %c2_i32_7 = arith.constant 2 : i32
    %17 = arith.addi %c2_i32_7, %4 : i32
    %18 = arith.index_cast %17 : i32 to index
    %c0_8 = arith.constant 0 : index
    %19 = vector.load %arg20[%18, %c0_8] : memref<68x32xf32, #tpu.memory_space<vmem>>, vector<64x32xf32>
    %20 = arith.truncf %19 : vector<64x32xf32> to vector<64x32xbf16>
    %21 = arith.index_cast %arg1 : i32 to index
    %c0_9 = arith.constant 0 : index
    %c0_10 = arith.constant 0 : index
    %c0_11 = arith.constant 0 : index
    %22 = vector.load %arg7[%21, %c0_9, %c0_10, %c0_11] : memref<4x3x32x32xbf16, #tpu.memory_space<vmem>>, vector<1x3x32x32xbf16>
    %23 = vector.shape_cast %22 : vector<1x3x32x32xbf16> to vector<3x32x32xbf16>
    %24 = arith.index_cast %arg1 : i32 to index
    %c0_12 = arith.constant 0 : index
    %c0_13 = arith.constant 0 : index
    %c0_14 = arith.constant 0 : index
    %25 = vector.load %arg9[%24, %c0_12, %c0_13, %c0_14] : memref<4x3x32x32xbf16, #tpu.memory_space<vmem>>, vector<1x3x32x32xbf16>
    %26 = vector.shape_cast %25 : vector<1x3x32x32xbf16> to vector<3x32x32xbf16>
    %27 = vector.extract_strided_slice %23 {offsets = [0, 0, 0], sizes = [1, 32, 32], strides = [1, 1, 1]} : vector<3x32x32xbf16> to vector<1x32x32xbf16>
    %28 = vector.shape_cast %27 : vector<1x32x32xbf16> to vector<32x32xbf16>
    %cst = arith.constant dense<0.000000e+00> : vector<64x32xf32>
    %29 = tpu.matmul %16, %28, %cst {dimension_numbers = #tpu.dot_dimension_numbers<[1], [0], [0], [1], [0, 0, 1, 1], [], []>} : vector<64x32xbf16>, vector<32x32xbf16>, vector<64x32xf32> -> vector<64x32xf32>
    %30 = vector.extract_strided_slice %23 {offsets = [1, 0, 0], sizes = [1, 32, 32], strides = [1, 1, 1]} : vector<3x32x32xbf16> to vector<1x32x32xbf16>
    %31 = vector.shape_cast %30 : vector<1x32x32xbf16> to vector<32x32xbf16>
    %cst_15 = arith.constant dense<0.000000e+00> : vector<64x32xf32>
    %32 = tpu.matmul %12, %31, %cst_15 {dimension_numbers = #tpu.dot_dimension_numbers<[1], [0], [0], [1], [0, 0, 1, 1], [], []>} : vector<64x32xbf16>, vector<32x32xbf16>, vector<64x32xf32> -> vector<64x32xf32>
    %33 = arith.addf %29, %32 : vector<64x32xf32>
    %34 = vector.extract_strided_slice %23 {offsets = [2, 0, 0], sizes = [1, 32, 32], strides = [1, 1, 1]} : vector<3x32x32xbf16> to vector<1x32x32xbf16>
    %35 = vector.shape_cast %34 : vector<1x32x32xbf16> to vector<32x32xbf16>
    %cst_16 = arith.constant dense<0.000000e+00> : vector<64x32xf32>
    %36 = tpu.matmul %20, %35, %cst_16 {dimension_numbers = #tpu.dot_dimension_numbers<[1], [0], [0], [1], [0, 0, 1, 1], [], []>} : vector<64x32xbf16>, vector<32x32xbf16>, vector<64x32xf32> -> vector<64x32xf32>
    %37 = arith.addf %33, %36 : vector<64x32xf32>
    %38 = arith.index_cast %arg1 : i32 to index
    %c0_17 = arith.constant 0 : index
    %c0_18 = arith.constant 0 : index
    %39 = vector.load %arg8[%38, %c0_17, %c0_18] : memref<4x1x32xf32, #tpu.memory_space<vmem>>, vector<1x1x32xf32>
    %40 = vector.shape_cast %39 : vector<1x1x32xf32> to vector<1x32xf32>
    %41 = vector.broadcast %40 : vector<1x32xf32> to vector<64x32xf32>
    %42 = arith.addf %37, %41 : vector<64x32xf32>
    %43 = vector.extract_strided_slice %26 {offsets = [0, 0, 0], sizes = [1, 32, 32], strides = [1, 1, 1]} : vector<3x32x32xbf16> to vector<1x32x32xbf16>
    %44 = vector.shape_cast %43 : vector<1x32x32xbf16> to vector<32x32xbf16>
    %cst_19 = arith.constant dense<0.000000e+00> : vector<64x32xf32>
    %45 = tpu.matmul %16, %44, %cst_19 {dimension_numbers = #tpu.dot_dimension_numbers<[1], [0], [0], [1], [0, 0, 1, 1], [], []>} : vector<64x32xbf16>, vector<32x32xbf16>, vector<64x32xf32> -> vector<64x32xf32>
    %46 = vector.extract_strided_slice %26 {offsets = [1, 0, 0], sizes = [1, 32, 32], strides = [1, 1, 1]} : vector<3x32x32xbf16> to vector<1x32x32xbf16>
    %47 = vector.shape_cast %46 : vector<1x32x32xbf16> to vector<32x32xbf16>
    %cst_20 = arith.constant dense<0.000000e+00> : vector<64x32xf32>
    %48 = tpu.matmul %12, %47, %cst_20 {dimension_numbers = #tpu.dot_dimension_numbers<[1], [0], [0], [1], [0, 0, 1, 1], [], []>} : vector<64x32xbf16>, vector<32x32xbf16>, vector<64x32xf32> -> vector<64x32xf32>
    %49 = arith.addf %45, %48 : vector<64x32xf32>
    %50 = vector.extract_strided_slice %26 {offsets = [2, 0, 0], sizes = [1, 32, 32], strides = [1, 1, 1]} : vector<3x32x32xbf16> to vector<1x32x32xbf16>
    %51 = vector.shape_cast %50 : vector<1x32x32xbf16> to vector<32x32xbf16>
    %cst_21 = arith.constant dense<0.000000e+00> : vector<64x32xf32>
    %52 = tpu.matmul %20, %51, %cst_21 {dimension_numbers = #tpu.dot_dimension_numbers<[1], [0], [0], [1], [0, 0, 1, 1], [], []>} : vector<64x32xbf16>, vector<32x32xbf16>, vector<64x32xf32> -> vector<64x32xf32>
    %53 = arith.addf %49, %52 : vector<64x32xf32>
    %54 = arith.index_cast %arg1 : i32 to index
    %c0_22 = arith.constant 0 : index
    %c0_23 = arith.constant 0 : index
    %55 = vector.load %arg10[%54, %c0_22, %c0_23] : memref<4x1x32xf32, #tpu.memory_space<vmem>>, vector<1x1x32xf32>
    %56 = vector.shape_cast %55 : vector<1x1x32xf32> to vector<1x32xf32>
    %57 = vector.broadcast %56 : vector<1x32xf32> to vector<64x32xf32>
    %58 = arith.addf %53, %57 : vector<64x32xf32>
    %59 = arith.negf %42 : vector<64x32xf32>
    %60 = math.exp %59 : vector<64x32xf32>
    %cst_24 = arith.constant 1.000000e+00 : f32
    %61 = vector.broadcast %cst_24 : f32 to vector<64x32xf32>
    %62 = arith.addf %61, %60 : vector<64x32xf32>
    %63 = arith.divf %61, %62 : vector<64x32xf32>
    %64 = math.tanh %58 : vector<64x32xf32>
    %65 = arith.mulf %63, %64 : vector<64x32xf32>
    %cst_25 = arith.constant 5.000000e-01 : f32
    %66 = vector.broadcast %cst_25 : f32 to vector<64x32xf32>
    %67 = arith.cmpf ogt, %65, %66 : vector<64x32xf32>
    %68 = arith.extui %67 : vector<64x32xi1> to vector<64x32xi32>
    %69 = arith.sitofp %68 : vector<64x32xi32> to vector<64x32xf32>
    %70 = arith.truncf %69 : vector<64x32xf32> to vector<64x32xbf16>
    %71 = arith.index_cast %arg1 : i32 to index
    %c0_26 = arith.constant 0 : index
    %c0_27 = arith.constant 0 : index
    %72 = vector.load %arg11[%71, %c0_26, %c0_27] : memref<4x32x32xbf16, #tpu.memory_space<vmem>>, vector<1x32x32xbf16>
    %73 = vector.shape_cast %72 : vector<1x32x32xbf16> to vector<32x32xbf16>
    %cst_28 = arith.constant dense<0.000000e+00> : vector<64x32xf32>
    %74 = tpu.matmul %70, %73, %cst_28 {dimension_numbers = #tpu.dot_dimension_numbers<[1], [0], [0], [1], [0, 0, 1, 1], [], []>} : vector<64x32xbf16>, vector<32x32xbf16>, vector<64x32xf32> -> vector<64x32xf32>
    %75 = arith.index_cast %arg1 : i32 to index
    %c0_29 = arith.constant 0 : index
    %c0_30 = arith.constant 0 : index
    %76 = vector.load %arg12[%75, %c0_29, %c0_30] : memref<4x1x32xf32, #tpu.memory_space<vmem>>, vector<1x1x32xf32>
    %77 = vector.shape_cast %76 : vector<1x1x32xf32> to vector<1x32xf32>
    %78 = vector.broadcast %77 : vector<1x32xf32> to vector<64x32xf32>
    %79 = arith.addf %74, %78 : vector<64x32xf32>
    %80 = arith.index_cast %arg1 : i32 to index
    %c0_31 = arith.constant 0 : index
    %c0_32 = arith.constant 0 : index
    %81 = vector.load %arg13[%80, %c0_31, %c0_32] : memref<4x32x32xbf16, #tpu.memory_space<vmem>>, vector<1x32x32xbf16>
    %82 = vector.shape_cast %81 : vector<1x32x32xbf16> to vector<32x32xbf16>
    %cst_33 = arith.constant dense<0.000000e+00> : vector<64x32xf32>
    %83 = tpu.matmul %70, %82, %cst_33 {dimension_numbers = #tpu.dot_dimension_numbers<[1], [0], [0], [1], [0, 0, 1, 1], [], []>} : vector<64x32xbf16>, vector<32x32xbf16>, vector<64x32xf32> -> vector<64x32xf32>
    %84 = arith.index_cast %arg1 : i32 to index
    %c0_34 = arith.constant 0 : index
    %c0_35 = arith.constant 0 : index
    %85 = vector.load %arg14[%84, %c0_34, %c0_35] : memref<4x1x32xf32, #tpu.memory_space<vmem>>, vector<1x1x32xf32>
    %86 = vector.shape_cast %85 : vector<1x1x32xf32> to vector<1x32xf32>
    %87 = vector.broadcast %86 : vector<1x32xf32> to vector<64x32xf32>
    %88 = arith.addf %83, %87 : vector<64x32xf32>
    %89 = arith.addf %5, %79 : vector<64x32xf32>
    %c0_36 = arith.constant 0 : index
    %c0_37 = arith.constant 0 : index
    %90 = vector.load %arg18[%c0_36, %c0_37] : memref<64x32xf32, #tpu.memory_space<vmem>>, vector<64x32xf32>
    tpu.vector_store %arg18[%c0_36, %c0_37], %89 {strides = array<i32>} : memref<64x32xf32, #tpu.memory_space<vmem>>, vector<64x32xf32>,
    %c0_38 = arith.constant 0 : index
    %c0_39 = arith.constant 0 : index
    %91 = vector.load %arg19[%c0_38, %c0_39] : memref<64x32xf32, #tpu.memory_space<vmem>>, vector<64x32xf32>
    %cst_40 = arith.constant 5.000000e-01 : f32
    %92 = vector.broadcast %cst_40 : f32 to vector<64x32xf32>
    %93 = arith.cmpf ogt, %88, %92 : vector<64x32xf32>
    %94 = arith.extui %93 : vector<64x32xi1> to vector<64x32xi32>
    %95 = arith.sitofp %94 : vector<64x32xi32> to vector<64x32xf32>
    %96 = arith.addf %91, %95 : vector<64x32xf32>
    %c0_41 = arith.constant 0 : index
    %c0_42 = arith.constant 0 : index
    %97 = vector.load %arg19[%c0_41, %c0_42] : memref<64x32xf32, #tpu.memory_space<vmem>>, vector<64x32xf32>
    tpu.vector_store %arg19[%c0_41, %c0_42], %96 {strides = array<i32>} : memref<64x32xf32, #tpu.memory_space<vmem>>, vector<64x32xf32>,
    %c3_i32 = arith.constant 3 : i32
    %98 = arith.cmpi eq, %arg1, %c3_i32 : i32
    %99 = arith.extui %98 : i1 to i32
    %c0_i32_43 = arith.constant 0 : i32
    %100 = arith.cmpi ne, %99, %c0_i32_43 : i32
    scf.if %100 {
      %c0_44 = arith.constant 0 : index
      %c0_45 = arith.constant 0 : index
      %101 = vector.load %arg19[%c0_44, %c0_45] : memref<64x32xf32, #tpu.memory_space<vmem>>, vector<64x32xf32>
      %cst_46 = arith.constant 2.500000e-01 : f32
      %102 = vector.broadcast %cst_46 : f32 to vector<64x32xf32>
      %103 = arith.mulf %101, %102 : vector<64x32xf32>
      %cst_47 = arith.constant 0.000000e+00 : f32
      %104 = vector.broadcast %cst_47 : f32 to vector<64x32xf32>
      %105 = arith.maximumf %103, %104 : vector<64x32xf32>
      %c0_48 = arith.constant 0 : index
      %c0_49 = arith.constant 0 : index
      %106 = vector.load %arg15[%c0_48, %c0_49] : memref<1x32xf32, #tpu.memory_space<vmem>>, vector<1x32xf32>
      %cst_50 = arith.constant dense<0.000000e+00> : vector<1x64xf32>
      %107 = tpu.matmul %106, %105, %cst_50 {dimension_numbers = #tpu.dot_dimension_numbers<[1], [1], [0], [0], [0, 0, 1, 0], [], []>} : vector<1x32xf32>, vector<64x32xf32>, vector<1x64xf32> -> vector<1x64xf32>
      %c0_51 = arith.constant 0 : index
      %c0_52 = arith.constant 0 : index
      %108 = vector.load %arg16[%c0_51, %c0_52] : memref<1x1xf32, #tpu.memory_space<vmem>>, vector<1x1xf32>
      %109 = vector.broadcast %108 : vector<1x1xf32> to vector<1x64xf32>
      %110 = arith.addf %107, %109 : vector<1x64xf32>
      %c0_53 = arith.constant 0 : index
      %c0_54 = arith.constant 0 : index
      %c0_55 = arith.constant 0 : index
      %111 = vector.load %arg17[%c0_53, %c0_54, %c0_55] : memref<1x1x64xf32, #tpu.memory_space<vmem>>, vector<1x1x64xf32>
      %112 = vector.shape_cast %111 : vector<1x1x64xf32> to vector<1x64xf32>
      %113 = vector.shape_cast %110 : vector<1x64xf32> to vector<1x1x64xf32>
      tpu.vector_store %arg17[%c0_53, %c0_54, %c0_55], %113 {strides = array<i32>} : memref<1x1x64xf32, #tpu.memory_space<vmem>>, vector<1x1x64xf32>,
    } else {
    }
    return
  }
  func.func @transform_0(%arg0: i32, %arg1: i32, %arg2: memref<4xi32, #tpu.memory_space<smem>>) -> (i32, i32, i32) {
    %c0_i32 = arith.constant 0 : i32
    %c0_i32_0 = arith.constant 0 : i32
    %c0_i32_1 = arith.constant 0 : i32
    return %arg0, %c0_i32, %c0_i32_0 : i32, i32, i32
  }
  func.func @transform_1(%arg0: i32, %arg1: i32, %arg2: memref<4xi32, #tpu.memory_space<smem>>) -> (i32, i32) {
    %c0_i32 = arith.constant 0 : i32
    %c0_i32_0 = arith.constant 0 : i32
    %c0_i32_1 = arith.constant 0 : i32
    return %c0_i32, %c0_i32_0 : i32, i32
  }
  func.func @transform_2(%arg0: i32, %arg1: i32, %arg2: memref<4xi32, #tpu.memory_space<smem>>) -> (i32, i32) {
    %c0_i32 = arith.constant 0 : i32
    %c0_i32_0 = arith.constant 0 : i32
    %c0_i32_1 = arith.constant 0 : i32
    return %c0_i32, %c0_i32_0 : i32, i32
  }
  func.func @transform_3(%arg0: i32, %arg1: i32, %arg2: memref<4xi32, #tpu.memory_space<smem>>) -> (i32, i32, i32, i32) {
    %c0_i32 = arith.constant 0 : i32
    %c0_i32_0 = arith.constant 0 : i32
    %c0_i32_1 = arith.constant 0 : i32
    %c0_i32_2 = arith.constant 0 : i32
    return %c0_i32, %arg0, %c0_i32_0, %c0_i32_1 : i32, i32, i32, i32
  }
  func.func @transform_4(%arg0: i32, %arg1: i32, %arg2: memref<4xi32, #tpu.memory_space<smem>>) -> (i32, i32, i32, i32) {
    %c0_i32 = arith.constant 0 : i32
    %c0_i32_0 = arith.constant 0 : i32
    %c0_i32_1 = arith.constant 0 : i32
    %c0_i32_2 = arith.constant 0 : i32
    %c0_i32_3 = arith.constant 0 : i32
    return %c0_i32, %c0_i32_0, %c0_i32_1, %c0_i32_2 : i32, i32, i32, i32
  }
  func.func @transform_5(%arg0: i32, %arg1: i32, %arg2: memref<4xi32, #tpu.memory_space<smem>>) -> (i32, i32, i32) {
    %c0_i32 = arith.constant 0 : i32
    %c0_i32_0 = arith.constant 0 : i32
    %c0_i32_1 = arith.constant 0 : i32
    %c0_i32_2 = arith.constant 0 : i32
    return %c0_i32, %c0_i32_0, %c0_i32_1 : i32, i32, i32
  }
  func.func @transform_6(%arg0: i32, %arg1: i32, %arg2: memref<4xi32, #tpu.memory_space<smem>>) -> (i32, i32, i32, i32) {
    %c0_i32 = arith.constant 0 : i32
    %c0_i32_0 = arith.constant 0 : i32
    %c0_i32_1 = arith.constant 0 : i32
    %c0_i32_2 = arith.constant 0 : i32
    %c0_i32_3 = arith.constant 0 : i32
    return %c0_i32, %c0_i32_0, %c0_i32_1, %c0_i32_2 : i32, i32, i32, i32
  }
  func.func @transform_7(%arg0: i32, %arg1: i32, %arg2: memref<4xi32, #tpu.memory_space<smem>>) -> (i32, i32, i32) {
    %c0_i32 = arith.constant 0 : i32
    %c0_i32_0 = arith.constant 0 : i32
    %c0_i32_1 = arith.constant 0 : i32
    %c0_i32_2 = arith.constant 0 : i32
    return %c0_i32, %c0_i32_0, %c0_i32_1 : i32, i32, i32
  }
  func.func @transform_8(%arg0: i32, %arg1: i32, %arg2: memref<4xi32, #tpu.memory_space<smem>>) -> (i32, i32, i32) {
    %c0_i32 = arith.constant 0 : i32
    %c0_i32_0 = arith.constant 0 : i32
    %c0_i32_1 = arith.constant 0 : i32
    %c0_i32_2 = arith.constant 0 : i32
    return %c0_i32, %c0_i32_0, %c0_i32_1 : i32, i32, i32
  }
  func.func @transform_9(%arg0: i32, %arg1: i32, %arg2: memref<4xi32, #tpu.memory_space<smem>>) -> (i32, i32, i32) {
    %c0_i32 = arith.constant 0 : i32
    %c0_i32_0 = arith.constant 0 : i32
    %c0_i32_1 = arith.constant 0 : i32
    %c0_i32_2 = arith.constant 0 : i32
    return %c0_i32, %c0_i32_0, %c0_i32_1 : i32, i32, i32
  }
  func.func @transform_10(%arg0: i32, %arg1: i32, %arg2: memref<4xi32, #tpu.memory_space<smem>>) -> (i32, i32, i32) {
    %c0_i32 = arith.constant 0 : i32
    %c0_i32_0 = arith.constant 0 : i32
    %c0_i32_1 = arith.constant 0 : i32
    %c0_i32_2 = arith.constant 0 : i32
    return %c0_i32, %c0_i32_0, %c0_i32_1 : i32, i32, i32
  }
  func.func @transform_11(%arg0: i32, %arg1: i32, %arg2: memref<4xi32, #tpu.memory_space<smem>>) -> (i32, i32, i32) {
    %c0_i32 = arith.constant 0 : i32
    %c0_i32_0 = arith.constant 0 : i32
    %c0_i32_1 = arith.constant 0 : i32
    %c0_i32_2 = arith.constant 0 : i32
    return %c0_i32, %c0_i32_0, %c0_i32_1 : i32, i32, i32
  }
  func.func @transform_12(%arg0: i32, %arg1: i32, %arg2: memref<4xi32, #tpu.memory_space<smem>>) -> (i32, i32) {
    %c0_i32 = arith.constant 0 : i32
    %c0_i32_0 = arith.constant 0 : i32
    %c0_i32_1 = arith.constant 0 : i32
    return %c0_i32, %c0_i32_0 : i32, i32
  }
  func.func @transform_13(%arg0: i32, %arg1: i32, %arg2: memref<4xi32, #tpu.memory_space<smem>>) -> (i32, i32) {
    %c0_i32 = arith.constant 0 : i32
    %c0_i32_0 = arith.constant 0 : i32
    %c0_i32_1 = arith.constant 0 : i32
    return %c0_i32, %c0_i32_0 : i32, i32
  }
  func.func @transform_14(%arg0: i32, %arg1: i32, %arg2: memref<4xi32, #tpu.memory_space<smem>>) -> (i32, i32, i32) {
    %c0_i32 = arith.constant 0 : i32
    %c0_i32_0 = arith.constant 0 : i32
    %c0_i32_1 = arith.constant 0 : i32
    return %arg0, %c0_i32, %c0_i32_0 : i32, i32, i32
  }
}

</mosaic_0001>

<llo_original>
// kernel: diffwave_forward.1
$region0: #{diffwave_forward.1}
  #allocation0 [shape = 'u32[]', space=smem, size = 0x4, offset = 0x4, fixed_abs, tag = 'smem constant byte address 0x4 - core index']
  #allocation1 [shape = 'u32[144,128]{1,0:T(1,128)}', space=vmem, size = 0x12000, scoped, tag = 'internal scratch']
  #allocation2 [shape = 'f32[64,32]{1,0:T(8,128)}', space=vmem, size = 0x8000, scoped, tag = 'scratch operand']
  #allocation3 [shape = 'f32[64,32]{1,0:T(8,128)}', space=vmem, size = 0x8000, scoped, tag = 'scratch operand']
  #allocation4 [shape = 'f32[68,32]{1,0:T(8,128)}', space=vmem, size = 0x9000, scoped, tag = 'scratch operand']
  #allocation5 [shape = 's32[1]{0}', space=sflag, size = 0x4, scoped, tag = 'scoped memory for diffwave_forward.1']
  #allocation6 [shape = 'u8[512]{0}', space=smem, size = 0x200, scoped, tag = 'prefetched SMEM operand 0']
  #allocation7 [shape = 'f32[1,1]{1,0:T(1,128)S(1)}', space=vmem, size = 0x200, scoped, tag = 'scoped memory for diffwave_forward.1']
  %s0 = inlined_call_operand.hbm [shape: s32[4], index: 0, kind: input, shape index: {}]
  %s1 = inlined_call_operand.hbm [shape: f32[2,64,1], index: 1, kind: input, shape index: {}]
  %s2 = inlined_call_operand.hbm [shape: f32[1,32], index: 2, kind: input, shape index: {}]
  %s3 = inlined_call_operand.hbm [shape: f32[1,32], index: 3, kind: input, shape index: {}]
  %s4 = inlined_call_operand.hbm [shape: f32[4,2,1,32], index: 4, kind: input, shape index: {}]
  %s5 = inlined_call_operand.hbm [shape: bf16[4,3,32,32], index: 5, kind: input, shape index: {}]
  %s6 = inlined_call_operand.hbm [shape: f32[4,1,32], index: 6, kind: input, shape index: {}]
  %s7 = inlined_call_operand.hbm [shape: bf16[4,3,32,32], index: 7, kind: input, shape index: {}]
  %s8 = inlined_call_operand.hbm [shape: f32[4,1,32], index: 8, kind: input, shape index: {}]
  %s9 = inlined_call_operand.hbm [shape: bf16[4,32,32], index: 9, kind: input, shape index: {}]
  %s10 = inlined_call_operand.hbm [shape: f32[4,1,32], index: 10, kind: input, shape index: {}]
  %s11 = inlined_call_operand.hbm [shape: bf16[4,32,32], index: 11, kind: input, shape index: {}]
  %s12 = inlined_call_operand.hbm [shape: f32[4,1,32], index: 12, kind: input, shape index: {}]
  %s13 = inlined_call_operand.hbm [shape: f32[1,32], index: 13, kind: input, shape index: {}]
  %s14 = inlined_call_operand.<no memory space> [shape: f32[1,1], index: 14, kind: input, shape index: {}]
  %s15 = inlined_call_operand.hbm [shape: f32[2,1,64], index: 15, kind: output, shape index: {}]
  %s16 = sld [smem:[#allocation0]]
  $region149: #{diffwave_forward.1} parent=0
    _
  %s18 = ssub.s32 1, %s16
  %s19 = scalar_select 0, %s18, %s16
  %21 = dma.hbm_to_smem %s0, 16, [#allocation6], [#allocation5]
  %v22 = vstv %s14
  %23 = vst [vmem:[#allocation7] sm:$0x1] %v22
  %24 = dma.done [#allocation5], 16
  %25 = sfence
  $region1: #{diffwave_forward.1} parent=0
    #allocation8 [shape = 'u8[65536]{0}', space=vmem, size = 0x10000, scoped, tag = 'input window, operand 1']
    #allocation9 [shape = 's32[2]{0}', space=sflag, size = 0x8, scoped, tag = 'scoped memory for diffwave_forward.1']
    #allocation10 [shape = 's32[2]{0}', space=sflag, size = 0x8, scoped, tag = 'scoped memory for diffwave_forward.1']
    #allocation11 [shape = 'u8[512]{0}', space=vmem, size = 0x400, scoped, tag = 'input window, operand 2, single buffered']
    #allocation12 [shape = 's32[1]{0}', space=sflag, size = 0x4, scoped, tag = 'scoped memory for diffwave_forward.1']
    #allocation13 [shape = 'u8[512]{0}', space=vmem, size = 0x400, scoped, tag = 'input window, operand 3, single buffered']
    #allocation14 [shape = 'u8[4096]{0}', space=vmem, size = 0x1000, scoped, tag = 'input window, operand 4']
    #allocation15 [shape = 's32[2]{0}', space=sflag, size = 0x8, scoped, tag = 'scoped memory for diffwave_forward.1']
    #allocation16 [shape = 'u8[98304]{0}', space=vmem, size = 0x18000, scoped, tag = 'input window, operand 5, single buffered']
    #allocation17 [shape = 'u8[2048]{0}', space=vmem, size = 0x800, scoped, tag = 'input window, operand 6, single buffered']
    #allocation18 [shape = 's32[1]{0}', space=sflag, size = 0x4, scoped, tag = 'scoped memory for diffwave_forward.1']
    #allocation19 [shape = 'u8[98304]{0}', space=vmem, size = 0x18000, scoped, tag = 'input window, operand 7, single buffered']
    #allocation20 [shape = 'u8[2048]{0}', space=vmem, size = 0x800, scoped, tag = 'input window, operand 8, single buffered']
    #allocation21 [shape = 's32[1]{0}', space=sflag, size = 0x4, scoped, tag = 'scoped memory for diffwave_forward.1']
    #allocation22 [shape = 'u8[32768]{0}', space=vmem, size = 0x8000, scoped, tag = 'input window, operand 9, single buffered']
    #allocation23 [shape = 'u8[2048]{0}', space=vmem, size = 0x800, scoped, tag = 'input window, operand 10, single buffered']
    #allocation24 [shape = 's32[1]{0}', space=sflag, size = 0x4, scoped, tag = 'scoped memory for diffwave_forward.1']
    #allocation25 [shape = 'u8[32768]{0}', space=vmem, size = 0x8000, scoped, tag = 'input window, operand 11, single buffered']
    #allocation26 [shape = 'u8[2048]{0}', space=vmem, size = 0x800, scoped, tag = 'input window, operand 12, single buffered']
    #allocation27 [shape = 's32[1]{0}', space=sflag, size = 0x4, scoped, tag = 'scoped memory for diffwave_forward.1']
    #allocation28 [shape = 'u8[512]{0}', space=vmem, size = 0x400, scoped, tag = 'input window, operand 13, single buffered']
    #allocation29 [shape = 'u8[1024]{0}', space=vmem, size = 0x400, scoped, tag = 'output window, operand 0']
    %26 = vsyncpa [#allocation9], 0
    %s27 = scalar_lea.sflag [#allocation9], 1
    %28 = vsyncpa %s27, 0
    %29 = vsyncpa [#allocation12], 0
    %30 = vsyncpa [#allocation15], 0
    %s31 = scalar_lea.sflag [#allocation15], 1
    %32 = vsyncpa %s31, 0
    %33 = vsyncpa [#allocation18], 0
    %34 = vsyncpa [#allocation21], 0
    %35 = vsyncpa [#allocation24], 0
    %36 = vsyncpa [#allocation27], 0
    %37 = vsyncpa [#allocation10], 0
    %s38 = scalar_lea.sflag [#allocation10], 1
    %39 = vsyncpa %s38, 0
    loop: start=0, step=1, limit=10
    $region2: #{diffwave_forward.1} parent=1 // loop_pre_header
      _
    $region3: #{diffwave_forward.1} parent=1 // loop_header
      %s41 = sphi 0, %s45
      %p42 = scmp.ge.s32.totalorder %s41, 10
      %s48 = sphi 0, %s60
      %s49 = sphi 0, %s56
      %s50 = sphi 0, %s48
      %s51 = sphi 0, %s49
      %s52 = sphi 0, %s50
      %s53 = sphi 0, %s51
      %s63 = sphi 0, %s65
      %s66 = sphi 0, %s63
      %s67 = sphi 0, %s66
      %s83 = sphi 0, %s67
      %s87 = sphi 0, %s87
      %s89 = sphi 0, %s87
      %s90 = sphi 0, %s89
      %s104 = sphi 0, %s90
      %s108 = sphi 0, %s108
      %s110 = sphi 0, %s108
      %s111 = sphi 0, %s110
      %s125 = sphi 0, %s111
      %s131 = sphi 0, %s133
      %s134 = sphi 0, %s131
      %s135 = sphi 0, %s134
      %s151 = sphi 0, %s135
      %s155 = sphi 0, %s155
      %s157 = sphi 0, %s155
      %s158 = sphi 0, %s157
      %s172 = sphi 0, %s158
      %s176 = sphi 0, %s176
      %s178 = sphi 0, %s176
      %s179 = sphi 0, %s178
      %s193 = sphi 0, %s179
      %s197 = sphi 0, %s197
      %s199 = sphi 0, %s197
      %s200 = sphi 0, %s199
      %s214 = sphi 0, %s200
      %s218 = sphi 0, %s218
      %s220 = sphi 0, %s218
      %s221 = sphi 0, %s220
      %s235 = sphi 0, %s221
      %s239 = sphi 0, %s239
      %s241 = sphi 0, %s239
      %s242 = sphi 0, %s241
      %s256 = sphi 0, %s242
      %s260 = sphi 0, %s260
      %s262 = sphi 0, %s260
      %s263 = sphi 0, %s262
      %s277 = sphi 0, %s263
      %s281 = sphi 0, %s281
      %s283 = sphi 0, %s281
      %s284 = sphi 0, %s283
      %s298 = sphi 0, %s284
      %s302 = sphi 0, %s302
      %s304 = sphi 0, %s302
      %s305 = sphi 0, %s304
      %s319 = sphi 0, %s305
      %s323 = sphi 0, %s323
      %s325 = sphi 0, %s323
      %s326 = sphi 0, %s325
      %s340 = sphi 0, %s326
      %s344 = sphi 0, %s344
      %s346 = sphi 0, %s344
      %s347 = sphi 0, %s346
      %s361 = sphi 0, %s347
      %s367 = sphi 0, %s369
      %s370 = sphi 0, %s367
      %s371 = sphi 0, %s370
      %s387 = sphi 0, %s371
    $region4: #{diffwave_forward.1} parent=1 // loop_header_branch
      %44 = sbr.rel (%p42) target = $region8
    $region5: #{diffwave_forward.1} parent=1 // loop_body
      %s46 = ssub.s32 %s41, 1
      %s47 = ssub.s32 %s41, 2
      %s54 = sadd.s32 1, %s49
      %p55 = scmp.ge.s32.totalorder %s54, 4
      %s56 = scalar_select %p55, 0, %s54
      %s57 = sadd.s32 1, %s48
      %s58 = scalar_select %p55, %s57, %s48
      %p59 = scmp.ge.s32.totalorder %s58, 2
      %s60 = scalar_select %p59, 0, %s58
      %s61 = ssub.s32 %s48, %s60
      %p62 = scmp.eq.s32.totalorder %s61, 0
      %s64 = sadd.s32 %s63, 1
      %s65 = scalar_select %p62, %s63, %s64
      %p68 = pneg %p62
      %p69 = scmp.eq.s32.totalorder %s41, 7
      %p70 = por %p68, %p69
      %p71 = scmp.ne.s32.totalorder %s63, %s66
      %p72 = scmp.eq.s32.totalorder %s41, 0
      %p73 = por %p71, %p72
      %p74 = scmp.ne.s32.totalorder %s63, %s66
      %p75 = scmp.eq.s32.totalorder %s46, 7
      %p76 = por %p74, %p75
      %p77 = scmp.ne.s32.totalorder %s66, %s67
      %p78 = scmp.eq.s32.totalorder %s46, 0
      %p79 = por %p77, %p78
      %p80 = scmp.ne.s32.totalorder %s66, %s67
      %p81 = scmp.eq.s32.totalorder %s47, 7
      %p82 = por %p80, %p81
      %p84 = scmp.ne.s32.totalorder %s67, %s83
      %p85 = scmp.eq.s32.totalorder %s47, 0
      %p86 = por %p84, %p85
      %s88 = sadd.s32 %s87, 1
      %p91 = scmp.eq.s32.totalorder %s41, 7
      %p92 = scmp.ne.s32.totalorder %s87, %s89
      %p93 = scmp.eq.s32.totalorder %s41, 0
      %p94 = por %p92, %p93
      %p95 = scmp.ne.s32.totalorder %s87, %s89
      %p96 = scmp.eq.s32.totalorder %s46, 7
      %p97 = por %p95, %p96
      %p98 = scmp.ne.s32.totalorder %s89, %s90
      %p99 = scmp.eq.s32.totalorder %s46, 0
      %p100 = por %p98, %p99
      %p101 = scmp.ne.s32.totalorder %s89, %s90
      %p102 = scmp.eq.s32.totalorder %s47, 7
      %p103 = por %p101, %p102
      %p105 = scmp.ne.s32.totalorder %s90, %s104
      %p106 = scmp.eq.s32.totalorder %s47, 0
      %p107 = por %p105, %p106
      %s109 = sadd.s32 %s108, 1
      %p112 = scmp.eq.s32.totalorder %s41, 7
      %p113 = scmp.ne.s32.totalorder %s108, %s110
      %p114 = scmp.eq.s32.totalorder %s41, 0
      %p115 = por %p113, %p114
      %p116 = scmp.ne.s32.totalorder %s108, %s110
      %p117 = scmp.eq.s32.totalorder %s46, 7
      %p118 = por %p116, %p117
      %p119 = scmp.ne.s32.totalorder %s110, %s111
      %p120 = scmp.eq.s32.totalorder %s46, 0
      %p121 = por %p119, %p120
      %p122 = scmp.ne.s32.totalorder %s110, %s111
      %p123 = scmp.eq.s32.totalorder %s47, 7
      %p124 = por %p122, %p123
      %p126 = scmp.ne.s32.totalorder %s111, %s125
      %p127 = scmp.eq.s32.totalorder %s47, 0
      %p128 = por %p126, %p127
      %s129 = ssub.s32 %s48, %s60
      %p130 = scmp.eq.s32.totalorder %s129, 0
      %s132 = sadd.s32 %s131, 1
      %s133 = scalar_select %p130, %s131, %s132
      %p136 = pneg %p130
      %p137 = scmp.eq.s32.totalorder %s41, 7
      %p138 = por %p136, %p137
      %p139 = scmp.ne.s32.totalorder %s131, %s134
      %p140 = scmp.eq.s32.totalorder %s41, 0
      %p141 = por %p139, %p140
      %p142 = scmp.ne.s32.totalorder %s131, %s134
      %p143 = scmp.eq.s32.totalorder %s46, 7
      %p144 = por %p142, %p143
      %p145 = scmp.ne.s32.totalorder %s134, %s135
      %p146 = scmp.eq.s32.totalorder %s46, 0
      %p147 = por %p145, %p146
      %p148 = scmp.ne.s32.totalorder %s134, %s135
      %p149 = scmp.eq.s32.totalorder %s47, 7
      %p150 = por %p148, %p149
      %p152 = scmp.ne.s32.totalorder %s135, %s151
      %p153 = scmp.eq.s32.totalorder %s47, 0
      %p154 = por %p152, %p153
      %s156 = sadd.s32 %s155, 1
      %p159 = scmp.eq.s32.totalorder %s41, 7
      %p160 = scmp.ne.s32.totalorder %s155, %s157
      %p161 = scmp.eq.s32.totalorder %s41, 0
      %p162 = por %p160, %p161
      %p163 = scmp.ne.s32.totalorder %s155, %s157
      %p164 = scmp.eq.s32.totalorder %s46, 7
      %p165 = por %p163, %p164
      %p166 = scmp.ne.s32.totalorder %s157, %s158
      %p167 = scmp.eq.s32.totalorder %s46, 0
      %p168 = por %p166, %p167
      %p169 = scmp.ne.s32.totalorder %s157, %s158
      %p170 = scmp.eq.s32.totalorder %s47, 7
      %p171 = por %p169, %p170
      %p173 = scmp.ne.s32.totalorder %s158, %s172
      %p174 = scmp.eq.s32.totalorder %s47, 0
      %p175 = por %p173, %p174
      %s177 = sadd.s32 %s176, 1
      %p180 = scmp.eq.s32.totalorder %s41, 7
      %p181 = scmp.ne.s32.totalorder %s176, %s178
      %p182 = scmp.eq.s32.totalorder %s41, 0
      %p183 = por %p181, %p182
      %p184 = scmp.ne.s32.totalorder %s176, %s178
      %p185 = scmp.eq.s32.totalorder %s46, 7
      %p186 = por %p184, %p185
      %p187 = scmp.ne.s32.totalorder %s178, %s179
      %p188 = scmp.eq.s32.totalorder %s46, 0
      %p189 = por %p187, %p188
      %p190 = scmp.ne.s32.totalorder %s178, %s179
      %p191 = scmp.eq.s32.totalorder %s47, 7
      %p192 = por %p190, %p191
      %p194 = scmp.ne.s32.totalorder %s179, %s193
      %p195 = scmp.eq.s32.totalorder %s47, 0
      %p196 = por %p194, %p195
      %s198 = sadd.s32 %s197, 1
      %p201 = scmp.eq.s32.totalorder %s41, 7
      %p202 = scmp.ne.s32.totalorder %s197, %s199
      %p203 = scmp.eq.s32.totalorder %s41, 0
      %p204 = por %p202, %p203
      %p205 = scmp.ne.s32.totalorder %s197, %s199
      %p206 = scmp.eq.s32.totalorder %s46, 7
      %p207 = por %p205, %p206
      %p208 = scmp.ne.s32.totalorder %s199, %s200
      %p209 = scmp.eq.s32.totalorder %s46, 0
      %p210 = por %p208, %p209
      %p211 = scmp.ne.s32.totalorder %s199, %s200
      %p212 = scmp.eq.s32.totalorder %s47, 7
      %p213 = por %p211, %p212
      %p215 = scmp.ne.s32.totalorder %s200, %s214
      %p216 = scmp.eq.s32.totalorder %s47, 0
      %p217 = por %p215, %p216
      %s219 = sadd.s32 %s218, 1
      %p222 = scmp.eq.s32.totalorder %s41, 7
      %p223 = scmp.ne.s32.totalorder %s218, %s220
      %p224 = scmp.eq.s32.totalorder %s41, 0
      %p225 = por %p223, %p224
      %p226 = scmp.ne.s32.totalorder %s218, %s220
      %p227 = scmp.eq.s32.totalorder %s46, 7
      %p228 = por %p226, %p227
      %p229 = scmp.ne.s32.totalorder %s220, %s221
      %p230 = scmp.eq.s32.totalorder %s46, 0
      %p231 = por %p229, %p230
      %p232 = scmp.ne.s32.totalorder %s220, %s221
      %p233 = scmp.eq.s32.totalorder %s47, 7
      %p234 = por %p232, %p233
      %p236 = scmp.ne.s32.totalorder %s221, %s235
      %p237 = scmp.eq.s32.totalorder %s47, 0
      %p238 = por %p236, %p237
      %s240 = sadd.s32 %s239, 1
      %p243 = scmp.eq.s32.totalorder %s41, 7
      %p244 = scmp.ne.s32.totalorder %s239, %s241
      %p245 = scmp.eq.s32.totalorder %s41, 0
      %p246 = por %p244, %p245
      %p247 = scmp.ne.s32.totalorder %s239, %s241
      %p248 = scmp.eq.s32.totalorder %s46, 7
      %p249 = por %p247, %p248
      %p250 = scmp.ne.s32.totalorder %s241, %s242
      %p251 = scmp.eq.s32.totalorder %s46, 0
      %p252 = por %p250, %p251
      %p253 = scmp.ne.s32.totalorder %s241, %s242
      %p254 = scmp.eq.s32.totalorder %s47, 7
      %p255 = por %p253, %p254
      %p257 = scmp.ne.s32.totalorder %s242, %s256
      %p258 = scmp.eq.s32.totalorder %s47, 0
      %p259 = por %p257, %p258
      %s261 = sadd.s32 %s260, 1
      %p264 = scmp.eq.s32.totalorder %s41, 7
      %p265 = scmp.ne.s32.totalorder %s260, %s262
      %p266 = scmp.eq.s32.totalorder %s41, 0
      %p267 = por %p265, %p266
      %p268 = scmp.ne.s32.totalorder %s260, %s262
      %p269 = scmp.eq.s32.totalorder %s46, 7
      %p270 = por %p268, %p269
      %p271 = scmp.ne.s32.totalorder %s262, %s263
      %p272 = scmp.eq.s32.totalorder %s46, 0
      %p273 = por %p271, %p272
      %p274 = scmp.ne.s32.totalorder %s262, %s263
      %p275 = scmp.eq.s32.totalorder %s47, 7
      %p276 = por %p274, %p275
      %p278 = scmp.ne.s32.totalorder %s263, %s277
      %p279 = scmp.eq.s32.totalorder %s47, 0
      %p280 = por %p278, %p279
      %s282 = sadd.s32 %s281, 1
      %p285 = scmp.eq.s32.totalorder %s41, 7
      %p286 = scmp.ne.s32.totalorder %s281, %s283
      %p287 = scmp.eq.s32.totalorder %s41, 0
      %p288 = por %p286, %p287
      %p289 = scmp.ne.s32.totalorder %s281, %s283
      %p290 = scmp.eq.s32.totalorder %s46, 7
      %p291 = por %p289, %p290
      %p292 = scmp.ne.s32.totalorder %s283, %s284
      %p293 = scmp.eq.s32.totalorder %s46, 0
      %p294 = por %p292, %p293
      %p295 = scmp.ne.s32.totalorder %s283, %s284
      %p296 = scmp.eq.s32.totalorder %s47, 7
      %p297 = por %p295, %p296
      %p299 = scmp.ne.s32.totalorder %s284, %s298
      %p300 = scmp.eq.s32.totalorder %s47, 0
      %p301 = por %p299, %p300
      %s303 = sadd.s32 %s302, 1
      %p306 = scmp.eq.s32.totalorder %s41, 7
      %p307 = scmp.ne.s32.totalorder %s302, %s304
      %p308 = scmp.eq.s32.totalorder %s41, 0
      %p309 = por %p307, %p308
      %p310 = scmp.ne.s32.totalorder %s302, %s304
      %p311 = scmp.eq.s32.totalorder %s46, 7
      %p312 = por %p310, %p311
      %p313 = scmp.ne.s32.totalorder %s304, %s305
      %p314 = scmp.eq.s32.totalorder %s46, 0
      %p315 = por %p313, %p314
      %p316 = scmp.ne.s32.totalorder %s304, %s305
      %p317 = scmp.eq.s32.totalorder %s47, 7
      %p318 = por %p316, %p317
      %p320 = scmp.ne.s32.totalorder %s305, %s319
      %p321 = scmp.eq.s32.totalorder %s47, 0
      %p322 = por %p320, %p321
      %s324 = sadd.s32 %s323, 1
      %p327 = scmp.eq.s32.totalorder %s41, 7
      %p328 = scmp.ne.s32.totalorder %s323, %s325
      %p329 = scmp.eq.s32.totalorder %s41, 0
      %p330 = por %p328, %p329
      %p331 = scmp.ne.s32.totalorder %s323, %s325
      %p332 = scmp.eq.s32.totalorder %s46, 7
      %p333 = por %p331, %p332
      %p334 = scmp.ne.s32.totalorder %s325, %s326
      %p335 = scmp.eq.s32.totalorder %s46, 0
      %p336 = por %p334, %p335
      %p337 = scmp.ne.s32.totalorder %s325, %s326
      %p338 = scmp.eq.s32.totalorder %s47, 7
      %p339 = por %p337, %p338
      %p341 = scmp.ne.s32.totalorder %s326, %s340
      %p342 = scmp.eq.s32.totalorder %s47, 0
      %p343 = por %p341, %p342
      %s345 = sadd.s32 %s344, 1
      %p348 = scmp.eq.s32.totalorder %s41, 7
      %p349 = scmp.ne.s32.totalorder %s344, %s346
      %p350 = scmp.eq.s32.totalorder %s41, 0
      %p351 = por %p349, %p350
      %p352 = scmp.ne.s32.totalorder %s344, %s346
      %p353 = scmp.eq.s32.totalorder %s46, 7
      %p354 = por %p352, %p353
      %p355 = scmp.ne.s32.totalorder %s346, %s347
      %p356 = scmp.eq.s32.totalorder %s46, 0
      %p357 = por %p355, %p356
      %p358 = scmp.ne.s32.totalorder %s346, %s347
      %p359 = scmp.eq.s32.totalorder %s47, 7
      %p360 = por %p358, %p359
      %p362 = scmp.ne.s32.totalorder %s347, %s361
      %p363 = scmp.eq.s32.totalorder %s47, 0
      %p364 = por %p362, %p363
      %s365 = ssub.s32 %s48, %s60
      %p366 = scmp.eq.s32.totalorder %s365, 0
      %s368 = sadd.s32 %s367, 1
      %s369 = scalar_select %p366, %s367, %s368
      %p372 = pneg %p366
      %p373 = scmp.eq.s32.totalorder %s41, 7
      %p374 = por %p372, %p373
      %p375 = scmp.ne.s32.totalorder %s367, %s370
      %p376 = scmp.eq.s32.totalorder %s41, 0
      %p377 = por %p375, %p376
      %p378 = scmp.ne.s32.totalorder %s367, %s370
      %p379 = scmp.eq.s32.totalorder %s46, 7
      %p380 = por %p378, %p379
      %p381 = scmp.ne.s32.totalorder %s370, %s371
      %p382 = scmp.eq.s32.totalorder %s46, 0
      %p383 = por %p381, %p382
      %p384 = scmp.ne.s32.totalorder %s370, %s371
      %p385 = scmp.eq.s32.totalorder %s47, 7
      %p386 = por %p384, %p385
      %p388 = scmp.ne.s32.totalorder %s371, %s387
      %p389 = scmp.eq.s32.totalorder %s47, 0
      %p390 = por %p388, %p389
      %p391 = scmp.le.s32.totalorder 1, %s41
      %p392 = scmp.lt.s32.totalorder %s41, 9
      %p393 = pnand %p391, %p392
      %p394 = pneg %p393
      // Predicated region
      $region9: #{diffwave_forward.1} parent=5 // pred_check
        _
      $region10: #{diffwave_forward.1} parent=5 // pred_check_branch
        %396 = sbr.rel (%p393) target = $region12
      $region11: #{diffwave_forward.1} parent=5 // pred_region
        %s397 = ssub.s32 %s41, 1
        // Predicated region
        $region13: #{diffwave_forward.1} parent=11 // pred_check
          %p398 = pneg %p100
        $region14: #{diffwave_forward.1} parent=11 // pred_check_branch
          %400 = sbr.rel (%p398) target = $region16
        $region15: #{diffwave_forward.1} parent=11 // pred_region
          %s402 = ssub.s32 16, 16
          %403 = vsyncadd [#allocation12], %s402
          %s405 = sshll.u32 [#allocation11], 4
          %s406 = int_to_ptr.vmem [resolvable:$true] %s405
          %408 = dma.hbm_to_vmem [thread:$0]  %s2, 16, %s406, [#allocation12]
        $region16: #{diffwave_forward.1} parent=11 // pred_fallthru
          _
        // Predicated region
        $region17: #{diffwave_forward.1} parent=11 // pred_check
          %p409 = pneg %p121
        $region18: #{diffwave_forward.1} parent=11 // pred_check_branch
          %411 = sbr.rel (%p409) target = $region20
        $region19: #{diffwave_forward.1} parent=11 // pred_region
          %s413 = ssub.s32 16, 16
          %414 = vsyncadd [#allocation12], %s413
          %s416 = sshll.u32 [#allocation13], 4
          %s417 = int_to_ptr.vmem [resolvable:$true] %s416
          %419 = dma.hbm_to_vmem [thread:$0]  %s3, 16, %s417, [#allocation12]
        $region20: #{diffwave_forward.1} parent=11 // pred_fallthru
          _
        // Predicated region
        $region21: #{diffwave_forward.1} parent=11 // pred_check
          %p420 = pneg %p168
        $region22: #{diffwave_forward.1} parent=11 // pred_check_branch
          %422 = sbr.rel (%p420) target = $region24
        $region23: #{diffwave_forward.1} parent=11 // pred_region
          %s424 = ssub.s32 3072, 3072
          %425 = vsyncadd [#allocation15], %s424
          %s426 = sshll.u32 [#allocation16], 4
          %s427 = int_to_ptr.vmem [resolvable:$true] %s426
          %432 = dma.hbm_to_vmem [thread:$0]  %s5, 3072, %s427, [#allocation15], 64, 64, 4
        $region24: #{diffwave_forward.1} parent=11 // pred_fallthru
          _
        // Predicated region
        $region25: #{diffwave_forward.1} parent=11 // pred_check
          %p433 = pneg %p189
        $region26: #{diffwave_forward.1} parent=11 // pred_check_branch
          %435 = sbr.rel (%p433) target = $region28
        $region27: #{diffwave_forward.1} parent=11 // pred_region
          %s437 = ssub.s32 64, 64
          %438 = vsyncadd [#allocation18], %s437
          %s439 = sshll.u32 [#allocation17], 4
          %s440 = int_to_ptr.vmem [resolvable:$true] %s439
          %445 = dma.hbm_to_vmem [thread:$0]  %s6, 64, %s440, [#allocation18], 16, 16, 1
        $region28: #{diffwave_forward.1} parent=11 // pred_fallthru
          _
        // Predicated region
        $region29: #{diffwave_forward.1} parent=11 // pred_check
          %p446 = pneg %p210
        $region30: #{diffwave_forward.1} parent=11 // pred_check_branch
          %448 = sbr.rel (%p446) target = $region32
        $region31: #{diffwave_forward.1} parent=11 // pred_region
          %s450 = ssub.s32 3072, 3072
          %451 = vsyncadd [#allocation18], %s450
          %s452 = sshll.u32 [#allocation19], 4
          %s453 = int_to_ptr.vmem [resolvable:$true] %s452
          %458 = dma.hbm_to_vmem [thread:$0]  %s7, 3072, %s453, [#allocation18], 64, 64, 4
        $region32: #{diffwave_forward.1} parent=11 // pred_fallthru
          _
        // Predicated region
        $region33: #{diffwave_forward.1} parent=11 // pred_check
          %p459 = pneg %p231
        $region34: #{diffwave_forward.1} parent=11 // pred_check_branch
          %461 = sbr.rel (%p459) target = $region36
        $region35: #{diffwave_forward.1} parent=11 // pred_region
          %s463 = ssub.s32 64, 64
          %464 = vsyncadd [#allocation21], %s463
          %s465 = sshll.u32 [#allocation20], 4
          %s466 = int_to_ptr.vmem [resolvable:$true] %s465
          %471 = dma.hbm_to_vmem [thread:$0]  %s8, 64, %s466, [#allocation21], 16, 16, 1
        $region36: #{diffwave_forward.1} parent=11 // pred_fallthru
          _
        // Predicated region
        $region37: #{diffwave_forward.1} parent=11 // pred_check
          %p472 = pneg %p252
        $region38: #{diffwave_forward.1} parent=11 // pred_check_branch
          %474 = sbr.rel (%p472) target = $region40
        $region39: #{diffwave_forward.1} parent=11 // pred_region
          %s476 = ssub.s32 1024, 1024
          %477 = vsyncadd [#allocation21], %s476
          %s478 = sshll.u32 [#allocation22], 4
          %s479 = int_to_ptr.vmem [resolvable:$true] %s478
          %484 = dma.hbm_to_vmem [thread:$0]  %s9, 1024, %s479, [#allocation21], 64, 64, 4
        $region40: #{diffwave_forward.1} parent=11 // pred_fallthru
          _
        // Predicated region
        $region41: #{diffwave_forward.1} parent=11 // pred_check
          %p485 = pneg %p273
        $region42: #{diffwave_forward.1} parent=11 // pred_check_branch
          %487 = sbr.rel (%p485) target = $region44
        $region43: #{diffwave_forward.1} parent=11 // pred_region
          %s489 = ssub.s32 64, 64
          %490 = vsyncadd [#allocation24], %s489
          %s491 = sshll.u32 [#allocation23], 4
          %s492 = int_to_ptr.vmem [resolvable:$true] %s491
          %497 = dma.hbm_to_vmem [thread:$0]  %s10, 64, %s492, [#allocation24], 16, 16, 1
        $region44: #{diffwave_forward.1} parent=11 // pred_fallthru
          _
        // Predicated region
        $region45: #{diffwave_forward.1} parent=11 // pred_check
          %p498 = pneg %p294
        $region46: #{diffwave_forward.1} parent=11 // pred_check_branch
          %500 = sbr.rel (%p498) target = $region48
        $region47: #{diffwave_forward.1} parent=11 // pred_region
          %s502 = ssub.s32 1024, 1024
          %503 = vsyncadd [#allocation24], %s502
          %s504 = sshll.u32 [#allocation25], 4
          %s505 = int_to_ptr.vmem [resolvable:$true] %s504
          %510 = dma.hbm_to_vmem [thread:$0]  %s11, 1024, %s505, [#allocation24], 64, 64, 4
        $region48: #{diffwave_forward.1} parent=11 // pred_fallthru
          _
        // Predicated region
        $region49: #{diffwave_forward.1} parent=11 // pred_check
          %p511 = pneg %p315
        $region50: #{diffwave_forward.1} parent=11 // pred_check_branch
          %513 = sbr.rel (%p511) target = $region52
        $region51: #{diffwave_forward.1} parent=11 // pred_region
          %s515 = ssub.s32 64, 64
          %516 = vsyncadd [#allocation27], %s515
          %s517 = sshll.u32 [#allocation26], 4
          %s518 = int_to_ptr.vmem [resolvable:$true] %s517
          %523 = dma.hbm_to_vmem [thread:$0]  %s12, 64, %s518, [#allocation27], 16, 16, 1
        $region52: #{diffwave_forward.1} parent=11 // pred_fallthru
          _
        // Predicated region
        $region53: #{diffwave_forward.1} parent=11 // pred_check
          %p524 = pneg %p336
        $region54: #{diffwave_forward.1} parent=11 // pred_check_branch
          %526 = sbr.rel (%p524) target = $region56
        $region55: #{diffwave_forward.1} parent=11 // pred_region
          %s528 = ssub.s32 16, 16
          %529 = vsyncadd [#allocation27], %s528
          %s531 = sshll.u32 [#allocation28], 4
          %s532 = int_to_ptr.vmem [resolvable:$true] %s531
          %534 = dma.hbm_to_vmem [thread:$0]  %s13, 16, %s532, [#allocation27]
        $region56: #{diffwave_forward.1} parent=11 // pred_fallthru
          _
        // Predicated region
        $region57: #{diffwave_forward.1} parent=11 // pred_check
          %p535 = pneg %p357
        $region58: #{diffwave_forward.1} parent=11 // pred_check_branch
          %537 = sbr.rel (%p535) target = $region60
        $region59: #{diffwave_forward.1} parent=11 // pred_region
          _
        $region60: #{diffwave_forward.1} parent=11 // pred_fallthru
          _
      $region12: #{diffwave_forward.1} parent=5 // pred_fallthru
        _
      %p538 = scmp.lt.s32.totalorder %s41, 8
      // Predicated region
      $region61: #{diffwave_forward.1} parent=5 // pred_check
        %p539 = pneg %p538
      $region62: #{diffwave_forward.1} parent=5 // pred_check_branch
        %541 = sbr.rel (%p539) target = $region64
      $region63: #{diffwave_forward.1} parent=5 // pred_region
        // Predicated region
        $region65: #{diffwave_forward.1} parent=63 // pred_check
          %p542 = pneg %p73
        $region66: #{diffwave_forward.1} parent=63 // pred_check_branch
          %544 = sbr.rel (%p542) target = $region68
        $region67: #{diffwave_forward.1} parent=63 // pred_region
          %s545 = sand.u32 %s63, 1
          %s546 = scalar_lea.sflag [#allocation9], %s545
          %s547 = sand.u32 %s63, 1
          %s548 = smul.addr %s547, 64
          %s549 = scalar_lea.vmem [#allocation8], %s548
          %s551 = ssub.s32 1024, 1024
          %552 = vsyncadd %s546, %s551
          %s553 = smul.addr %s48, 8
          %s554 = smul.addr %s553, 128
          %s555 = scalar_lea.hbm %s1, %s554
          %s556 = sshll.u32 %s549, 4
          %s557 = int_to_ptr.vmem [resolvable:$true] %s556
          %562 = dma.hbm_to_vmem [thread:$0]  %s555, 1024, %s557, %s546, 128, 128, 8
        $region68: #{diffwave_forward.1} parent=63 // pred_fallthru
          _
        // Predicated region
        $region69: #{diffwave_forward.1} parent=63 // pred_check
          %p563 = pneg %p141
        $region70: #{diffwave_forward.1} parent=63 // pred_check_branch
          %565 = sbr.rel (%p563) target = $region72
        $region71: #{diffwave_forward.1} parent=63 // pred_region
          %s566 = sand.u32 %s41, 1
          %s567 = scalar_lea.sflag [#allocation15], %s566
          %s568 = sand.u32 %s131, 1
          %s569 = smul.addr %s568, 4
          %s570 = scalar_lea.vmem [#allocation14], %s569
          %s572 = ssub.s32 64, 64
          %573 = vsyncadd %s567, %s572
          %s574 = smul.addr %s48, 16
          %s575 = scalar_lea.hbm %s4, %s574
          %s576 = sshll.u32 %s570, 4
          %s577 = int_to_ptr.vmem [resolvable:$true] %s576
          %582 = dma.hbm_to_vmem [thread:$0]  %s575, 64, %s577, %s567, 32, 16, 1
        $region72: #{diffwave_forward.1} parent=63 // pred_fallthru
          _
      $region64: #{diffwave_forward.1} parent=5 // pred_fallthru
        _
      %p583 = scmp.le.s32.totalorder 1, %s41
      %p584 = scmp.lt.s32.totalorder %s41, 9
      %p585 = pnand %p583, %p584
      %p586 = pneg %p585
      // Predicated region
      $region73: #{diffwave_forward.1} parent=5 // pred_check
        _
      $region74: #{diffwave_forward.1} parent=5 // pred_check_branch
        %588 = sbr.rel (%p585) target = $region76
      $region75: #{diffwave_forward.1} parent=5 // pred_region
        %s589 = ssub.s32 %s41, 1
        %s590 = sand.u32 %s66, 1
        %s591 = scalar_lea.sflag [#allocation9], %s590
        %s592 = sand.u32 %s66, 1
        %s593 = smul.addr %s592, 64
        %s594 = scalar_lea.vmem [#allocation8], %s593
        // Predicated region
        $region77: #{diffwave_forward.1} parent=75 // pred_check
          %p595 = pneg %p79
        $region78: #{diffwave_forward.1} parent=75 // pred_check_branch
          %597 = sbr.rel (%p595) target = $region80
        $region79: #{diffwave_forward.1} parent=75 // pred_region
          %598 = dma.done %s591, 1024
        $region80: #{diffwave_forward.1} parent=75 // pred_fallthru
          _
        // Predicated region
        $region81: #{diffwave_forward.1} parent=75 // pred_check
          %p599 = pneg %p100
        $region82: #{diffwave_forward.1} parent=75 // pred_check_branch
          %601 = sbr.rel (%p599) target = $region84
        $region83: #{diffwave_forward.1} parent=75 // pred_region
          %602 = dma.done [#allocation12], 16
        $region84: #{diffwave_forward.1} parent=75 // pred_fallthru
          _
        // Predicated region
        $region85: #{diffwave_forward.1} parent=75 // pred_check
          %p603 = pneg %p121
        $region86: #{diffwave_forward.1} parent=75 // pred_check_branch
          %605 = sbr.rel (%p603) target = $region88
        $region87: #{diffwave_forward.1} parent=75 // pred_region
          %606 = dma.done [#allocation12], 16
        $region88: #{diffwave_forward.1} parent=75 // pred_fallthru
          _
        %s607 = sand.u32 %s46, 1
        %s608 = scalar_lea.sflag [#allocation15], %s607
        %s609 = sand.u32 %s134, 1
        %s610 = smul.addr %s609, 4
        %s611 = scalar_lea.vmem [#allocation14], %s610
        // Predicated region
        $region89: #{diffwave_forward.1} parent=75 // pred_check
          %p612 = pneg %p147
        $region90: #{diffwave_forward.1} parent=75 // pred_check_branch
          %614 = sbr.rel (%p612) target = $region92
        $region91: #{diffwave_forward.1} parent=75 // pred_region
          %615 = dma.done %s608, 64
        $region92: #{diffwave_forward.1} parent=75 // pred_fallthru
          _
        // Predicated region
        $region93: #{diffwave_forward.1} parent=75 // pred_check
          %p616 = pneg %p168
        $region94: #{diffwave_forward.1} parent=75 // pred_check_branch
          %618 = sbr.rel (%p616) target = $region96
        $region95: #{diffwave_forward.1} parent=75 // pred_region
          %619 = dma.done [#allocation15], 3072
        $region96: #{diffwave_forward.1} parent=75 // pred_fallthru
          _
        // Predicated region
        $region97: #{diffwave_forward.1} parent=75 // pred_check
          %p620 = pneg %p189
        $region98: #{diffwave_forward.1} parent=75 // pred_check_branch
          %622 = sbr.rel (%p620) target = $region100
        $region99: #{diffwave_forward.1} parent=75 // pred_region
          %623 = dma.done [#allocation18], 64
        $region100: #{diffwave_forward.1} parent=75 // pred_fallthru
          _
        // Predicated region
        $region101: #{diffwave_forward.1} parent=75 // pred_check
          %p624 = pneg %p210
        $region102: #{diffwave_forward.1} parent=75 // pred_check_branch
          %626 = sbr.rel (%p624) target = $region104
        $region103: #{diffwave_forward.1} parent=75 // pred_region
          %627 = dma.done [#allocation18], 3072
        $region104: #{diffwave_forward.1} parent=75 // pred_fallthru
          _
        // Predicated region
        $region105: #{diffwave_forward.1} parent=75 // pred_check
          %p628 = pneg %p231
        $region106: #{diffwave_forward.1} parent=75 // pred_check_branch
          %630 = sbr.rel (%p628) target = $region108
        $region107: #{diffwave_forward.1} parent=75 // pred_region
          %631 = dma.done [#allocation21], 64
        $region108: #{diffwave_forward.1} parent=75 // pred_fallthru
          _
        // Predicated region
        $region109: #{diffwave_forward.1} parent=75 // pred_check
          %p632 = pneg %p252
        $region110: #{diffwave_forward.1} parent=75 // pred_check_branch
          %634 = sbr.rel (%p632) target = $region112
        $region111: #{diffwave_forward.1} parent=75 // pred_region
          %635 = dma.done [#allocation21], 1024
        $region112: #{diffwave_forward.1} parent=75 // pred_fallthru
          _
        // Predicated region
        $region113: #{diffwave_forward.1} parent=75 // pred_check
          %p636 = pneg %p273
        $region114: #{diffwave_forward.1} parent=75 // pred_check_branch
          %638 = sbr.rel (%p636) target = $region116
        $region115: #{diffwave_forward.1} parent=75 // pred_region
          %639 = dma.done [#allocation24], 64
        $region116: #{diffwave_forward.1} parent=75 // pred_fallthru
          _
        // Predicated region
        $region117: #{diffwave_forward.1} parent=75 // pred_check
          %p640 = pneg %p294
        $region118: #{diffwave_forward.1} parent=75 // pred_check_branch
          %642 = sbr.rel (%p640) target = $region120
        $region119: #{diffwave_forward.1} parent=75 // pred_region
          %643 = dma.done [#allocation24], 1024
        $region120: #{diffwave_forward.1} parent=75 // pred_fallthru
          _
        // Predicated region
        $region121: #{diffwave_forward.1} parent=75 // pred_check
          %p644 = pneg %p315
        $region122: #{diffwave_forward.1} parent=75 // pred_check_branch
          %646 = sbr.rel (%p644) target = $region124
        $region123: #{diffwave_forward.1} parent=75 // pred_region
          %647 = dma.done [#allocation27], 64
        $region124: #{diffwave_forward.1} parent=75 // pred_fallthru
          _
        // Predicated region
        $region125: #{diffwave_forward.1} parent=75 // pred_check
          %p648 = pneg %p336
        $region126: #{diffwave_forward.1} parent=75 // pred_check_branch
          %650 = sbr.rel (%p648) target = $region128
        $region127: #{diffwave_forward.1} parent=75 // pred_region
          %651 = dma.done [#allocation27], 16
        $region128: #{diffwave_forward.1} parent=75 // pred_fallthru
          _
        %s652 = sand.u32 %s66, 1
        %s653 = scalar_lea.sflag [#allocation9], %s652
        %s654 = sand.u32 %s66, 1
        %s655 = smul.addr %s654, 64
        %s656 = scalar_lea.vmem [#allocation8], %s655
        %p657 = pneg %p79
        %p658 = pneg %p76
        %p659 = pneg %p100
        %p660 = pneg %p97
        %p661 = pneg %p121
        %p662 = pneg %p118
        %s663 = sand.u32 %s46, 1
        %s664 = scalar_lea.sflag [#allocation15], %s663
        %s665 = sand.u32 %s134, 1
        %s666 = smul.addr %s665, 4
        %s667 = scalar_lea.vmem [#allocation14], %s666
        %p668 = pneg %p147
        %p669 = pneg %p144
        %p670 = pneg %p168
        %p671 = pneg %p165
        %p672 = pneg %p189
        %p673 = pneg %p186
        %p674 = pneg %p210
        %p675 = pneg %p207
        %p676 = pneg %p231
        %p677 = pneg %p228
        %p678 = pneg %p252
        %p679 = pneg %p249
        %p680 = pneg %p273
        %p681 = pneg %p270
        %p682 = pneg %p294
        %p683 = pneg %p291
        %p684 = pneg %p315
        %p685 = pneg %p312
        %p686 = pneg %p336
        %p687 = pneg %p333
        %p688 = pneg %p357
        %p689 = pneg %p354
        %p690 = pneg %p383
        %p691 = pneg %p380
        %s692 = sand.u32 %s370, 1
        %s693 = scalar_lea.sflag [#allocation10], %s692
        %s694 = sand.u32 %s370, 1
        %s695 = scalar_lea.vmem [#allocation29], %s694
        %p697 = scmp.eq.s32.totalorder %s51, 0
        // Predicated region
        $region129: #{diffwave_forward.1} parent=75 // pred_check
          %p698 = pneg %p697
        $region130: #{diffwave_forward.1} parent=75 // pred_check_branch
          %700 = sbr.rel (%p698) target = $region132
        $region131: #{diffwave_forward.1} parent=75 // pred_region
          %v701 = vld [vmem:[%s594] sm:$0xff]
          %v702 = vld [vmem:[%s594 + $0x8] sm:$0xff]
          %v703 = vld [vmem:[%s594 + $0x10] sm:$0xff]
          %v704 = vld [vmem:[%s594 + $0x18] sm:$0xff]
          %v705 = vld [vmem:[%s594 + $0x20] sm:$0xff]
          %v706 = vld [vmem:[%s594 + $0x28] sm:$0xff]
          %v707 = vld [vmem:[%s594 + $0x30] sm:$0xff]
          %v708 = vld [vmem:[%s594 + $0x38] sm:$0xff]
          %v709 = vld [vmem:[#allocation11] sm:$0x1]
          %711 = vset.pattern.permute.xlu0 0
          %712 = vperm.xlu0 %711, %v701
          %v713 = vpop.permute.xlu0 %712
          %716 = vset.pattern.permute.xlu0 0
          %717 = vperm.xlu0 %716, %v702
          %v718 = vpop.permute.xlu0 %717
          %721 = vset.pattern.permute.xlu0 0
          %722 = vperm.xlu0 %721, %v703
          %v723 = vpop.permute.xlu0 %722
          %726 = vset.pattern.permute.xlu0 0
          %727 = vperm.xlu0 %726, %v704
          %v728 = vpop.permute.xlu0 %727
          %731 = vset.pattern.permute.xlu0 0
          %732 = vperm.xlu0 %731, %v705
          %v733 = vpop.permute.xlu0 %732
          %736 = vset.pattern.permute.xlu0 0
          %737 = vperm.xlu0 %736, %v706
          %v738 = vpop.permute.xlu0 %737
          %741 = vset.pattern.permute.xlu0 0
          %742 = vperm.xlu0 %741, %v707
          %v743 = vpop.permute.xlu0 %742
          %746 = vset.pattern.permute.xlu0 0
          %747 = vperm.xlu0 %746, %v708
          %v748 = vpop.permute.xlu0 %747
          %v751 = vlaneseq
          %v752 = vshrl.u32 %v751, 7
          %v753 = vsub.s32 0, %v752
          %v754 = vrot.slane %v709, %v753
          %v756 = vmul.f32 %v713, %v754
          %v757 = vmul.f32 %v718, %v754
          %v758 = vmul.f32 %v723, %v754
          %v759 = vmul.f32 %v728, %v754
          %v760 = vmul.f32 %v733, %v754
          %v761 = vmul.f32 %v738, %v754
          %v762 = vmul.f32 %v743, %v754
          %v763 = vmul.f32 %v748, %v754
          %v764 = vld [vmem:[#allocation13] sm:$0x1]
          %v766 = vlaneseq
          %v767 = vshrl.u32 %v766, 7
          %v768 = vsub.s32 0, %v767
          %v769 = vrot.slane %v764, %v768
          %v771 = vadd.f32 %v756, %v769
          %v772 = vadd.f32 %v757, %v769
          %v773 = vadd.f32 %v758, %v769
          %v774 = vadd.f32 %v759, %v769
          %v775 = vadd.f32 %v760, %v769
          %v776 = vadd.f32 %v761, %v769
          %v777 = vadd.f32 %v762, %v769
          %v778 = vadd.f32 %v763, %v769
          %vm779 = vcmp.gt.f32.partialorder %v771, 0.5
          %vm780 = vcmp.gt.f32.partialorder %v772, 0.5
          %vm781 = vcmp.gt.f32.partialorder %v773, 0.5
          %vm782 = vcmp.gt.f32.partialorder %v774, 0.5
          %vm783 = vcmp.gt.f32.partialorder %v775, 0.5
          %vm784 = vcmp.gt.f32.partialorder %v776, 0.5
          %vm785 = vcmp.gt.f32.partialorder %v777, 0.5
          %vm786 = vcmp.gt.f32.partialorder %v778, 0.5
          %v787 = vsel %vm779, 1, 0
          %v788 = vsel %vm780, 1, 0
          %v789 = vsel %vm781, 1, 0
          %v790 = vsel %vm782, 1, 0
          %v791 = vsel %vm783, 1, 0
          %v792 = vsel %vm784, 1, 0
          %v793 = vsel %vm785, 1, 0
          %v794 = vsel %vm786, 1, 0
          %v795 = vcvt.s32.f32 %v787
          %v796 = vcvt.s32.f32 %v788
          %v797 = vcvt.s32.f32 %v789
          %v798 = vcvt.s32.f32 %v790
          %v799 = vcvt.s32.f32 %v791
          %v800 = vcvt.s32.f32 %v792
          %v801 = vcvt.s32.f32 %v793
          %v802 = vcvt.s32.f32 %v794
          %vm803 = vcmask 261120
          %804 = vst.msk [vmem:[#allocation2] sm:$0xff] %vm803, %v795
          %805 = vst.msk [vmem:[#allocation2 + $0x8] sm:$0xff] %vm803, %v796
          %806 = vst.msk [vmem:[#allocation2 + $0x10] sm:$0xff] %vm803, %v797
          %807 = vst.msk [vmem:[#allocation2 + $0x18] sm:$0xff] %vm803, %v798
          %808 = vst.msk [vmem:[#allocation2 + $0x20] sm:$0xff] %vm803, %v799
          %809 = vst.msk [vmem:[#allocation2 + $0x28] sm:$0xff] %vm803, %v800
          %810 = vst.msk [vmem:[#allocation2 + $0x30] sm:$0xff] %vm803, %v801
          %811 = vst.msk [vmem:[#allocation2 + $0x38] sm:$0xff] %vm803, %v802
          %812 = vst.msk [vmem:[#allocation3] sm:$0xff] %vm803, 0.0
          %813 = vst.msk [vmem:[#allocation3 + $0x8] sm:$0xff] %vm803, 0.0
          %814 = vst.msk [vmem:[#allocation3 + $0x10] sm:$0xff] %vm803, 0.0
          %815 = vst.msk [vmem:[#allocation3 + $0x18] sm:$0xff] %vm803, 0.0
          %816 = vst.msk [vmem:[#allocation3 + $0x20] sm:$0xff] %vm803, 0.0
          %817 = vst.msk [vmem:[#allocation3 + $0x28] sm:$0xff] %vm803, 0.0
          %818 = vst.msk [vmem:[#allocation3 + $0x30] sm:$0xff] %vm803, 0.0
          %819 = vst.msk [vmem:[#allocation3 + $0x38] sm:$0xff] %vm803, 0.0
          %vm820 = vcmask 254976
          %821 = vst.msk [vmem:[#allocation4] sm:$0x3] %vm820, 0.0
          %822 = vst.msk [vmem:[#allocation4 + $0x42] sm:$0x3] %vm820, 0.0
        $region132: #{diffwave_forward.1} parent=75 // pred_fallthru
          _
        %s823 = sld [smem:[#allocation6 + %s51]]
        %v824 = vld [vmem:[#allocation2] sm:$0xff]
        %v825 = vld [vmem:[#allocation2 + $0x8] sm:$0xff]
        %v826 = vld [vmem:[#allocation2 + $0x10] sm:$0xff]
        %v827 = vld [vmem:[#allocation2 + $0x18] sm:$0xff]
        %v828 = vld [vmem:[#allocation2 + $0x20] sm:$0xff]
        %v829 = vld [vmem:[#allocation2 + $0x28] sm:$0xff]
        %v830 = vld [vmem:[#allocation2 + $0x30] sm:$0xff]
        %v831 = vld [vmem:[#allocation2 + $0x38] sm:$0xff]
        %s832 = scalar_lea.vmem %s611, %s51 [#allocation14]
        %v833 = vld [vmem:[%s832] sm:$0x1]
        %v835 = vlaneseq
        %v836 = vshrl.u32 %v835, 7
        %v837 = vsub.s32 0, %v836
        %v838 = vrot.slane %v833, %v837
        %v840 = vadd.f32 %v824, %v838
        %v841 = vadd.f32 %v825, %v838
        %v842 = vadd.f32 %v826, %v838
        %v843 = vadd.f32 %v827, %v838
        %v844 = vadd.f32 %v828, %v838
        %v845 = vadd.f32 %v829, %v838
        %v846 = vadd.f32 %v830, %v838
        %v847 = vadd.f32 %v831, %v838
        %vm848 = vcmask 261120
        %849 = vst.msk [vmem:[#allocation4 + $0x2] sm:$0xff] %vm848, %v840
        %850 = vst.msk [vmem:[#allocation4 + $0xa] sm:$0xff] %vm848, %v841
        %851 = vst.msk [vmem:[#allocation4 + $0x12] sm:$0xff] %vm848, %v842
        %852 = vst.msk [vmem:[#allocation4 + $0x1a] sm:$0xff] %vm848, %v843
        %853 = vst.msk [vmem:[#allocation4 + $0x22] sm:$0xff] %vm848, %v844
        %854 = vst.msk [vmem:[#allocation4 + $0x2a] sm:$0xff] %vm848, %v845
        %855 = vst.msk [vmem:[#allocation4 + $0x32] sm:$0xff] %vm848, %v846
        %856 = vst.msk [vmem:[#allocation4 + $0x3a] sm:$0xff] %vm848, %v847
        %v857 = vpack.c.bf16 %v841, %v840
        %v858 = vpack.c.bf16 %v843, %v842
        %v859 = vpack.c.bf16 %v845, %v844
        %v860 = vpack.c.bf16 %v847, %v846
        %s861 = ssub.s32 2, %s823
        %s862 = scalar_lea.vmem [#allocation4], %s861
        %v863 = vld [vmem:[%s862] sm:$0xff]
        %v864 = vld [vmem:[%s862 + $0x8] sm:$0xff]
        %v865 = vld [vmem:[%s862 + $0x10] sm:$0xff]
        %v866 = vld [vmem:[%s862 + $0x18] sm:$0xff]
        %v867 = vld [vmem:[%s862 + $0x20] sm:$0xff]
        %v868 = vld [vmem:[%s862 + $0x28] sm:$0xff]
        %v869 = vld [vmem:[%s862 + $0x30] sm:$0xff]
        %v870 = vld [vmem:[%s862 + $0x38] sm:$0xff]
        %v871 = vpack.c.bf16 %v864, %v863
        %v872 = vpack.c.bf16 %v866, %v865
        %v873 = vpack.c.bf16 %v868, %v867
        %v874 = vpack.c.bf16 %v870, %v869
        %s875 = sadd.s32 %s823, 2
        %s876 = scalar_lea.vmem [#allocation4], %s875
        %v877 = vld [vmem:[%s876] sm:$0xff]
        %v878 = vld [vmem:[%s876 + $0x8] sm:$0xff]
        %v879 = vld [vmem:[%s876 + $0x10] sm:$0xff]
        %v880 = vld [vmem:[%s876 + $0x18] sm:$0xff]
        %v881 = vld [vmem:[%s876 + $0x20] sm:$0xff]
        %v882 = vld [vmem:[%s876 + $0x28] sm:$0xff]
        %v883 = vld [vmem:[%s876 + $0x30] sm:$0xff]
        %v884 = vld [vmem:[%s876 + $0x38] sm:$0xff]
        %v885 = vpack.c.bf16 %v878, %v877
        %v886 = vpack.c.bf16 %v880, %v879
        %v887 = vpack.c.bf16 %v882, %v881
        %v888 = vpack.c.bf16 %v884, %v883
        %s889 = smul.u32 %s51, 12
        %s890 = smul.addr %s889, 4
        %s891 = scalar_lea.vmem [#allocation16], %s890
        %v892 = vld [vmem:[%s891] sm:$0xf]
        %v893 = vld [vmem:[%s891 + $0x4] sm:$0xf]
        %v894 = vld [vmem:[%s891 + $0x8] sm:$0xf]
        %v895 = vld [vmem:[%s891 + $0xc] sm:$0xf]
        %v896 = vld [vmem:[%s891 + $0x10] sm:$0xf]
        %v897 = vld [vmem:[%s891 + $0x14] sm:$0xf]
        %v898 = vld [vmem:[%s891 + $0x18] sm:$0xf]
        %v899 = vld [vmem:[%s891 + $0x1c] sm:$0xf]
        %v900 = vld [vmem:[%s891 + $0x20] sm:$0xf]
        %v901 = vld [vmem:[%s891 + $0x24] sm:$0xf]
        %v902 = vld [vmem:[%s891 + $0x28] sm:$0xf]
        %v903 = vld [vmem:[%s891 + $0x2c] sm:$0xf]
        %s904 = smul.addr %s889, 4
        %s905 = scalar_lea.vmem [#allocation19], %s904
        %v906 = vld [vmem:[%s905] sm:$0xf]
        %v907 = vld [vmem:[%s905 + $0x4] sm:$0xf]
        %v908 = vld [vmem:[%s905 + $0x8] sm:$0xf]
        %v909 = vld [vmem:[%s905 + $0xc] sm:$0xf]
        %v910 = vld [vmem:[%s905 + $0x10] sm:$0xf]
        %v911 = vld [vmem:[%s905 + $0x14] sm:$0xf]
        %v912 = vld [vmem:[%s905 + $0x18] sm:$0xf]
        %v913 = vld [vmem:[%s905 + $0x1c] sm:$0xf]
        %v914 = vld [vmem:[%s905 + $0x20] sm:$0xf]
        %v915 = vld [vmem:[%s905 + $0x24] sm:$0xf]
        %v916 = vld [vmem:[%s905 + $0x28] sm:$0xf]
        %v917 = vld [vmem:[%s905 + $0x2c] sm:$0xf]
        %v922 = vunpack.c.l.b16 %v896
        %v923 = vunpack.c.l.b16 %v897
        %v924 = vunpack.c.l.b16 %v898
        %v925 = vunpack.c.l.b16 %v899
        %v926 = vpack.c.b16 %v923, %v922
        %v927 = vpack.c.b16 %v925, %v924
        %v931 = vsel %vm848, %v857, 0
        %v934 = vsel %vm848, %v858, 0
        %v937 = vsel %vm848, %v859, 0
        %v940 = vsel %vm848, %v860, 0
        %942 = vmatprep.subr.bf16.mxu0 0
        %943 = vmatpush1.bf16.msra.mxu0 %v926
        %944 = vmatprep.subr.bf16.mxu0 0
        %945 = vmatpush1.bf16.msra.mxu0 %v927
        %946 = vmatprep.subr.bf16.mxu0 0
        %947 = vmatpush1.bf16.msra.mxu0 0
        %948 = vmatprep.subr.bf16.mxu0 0
        %949 = vmatpush1.bf16.msra.mxu0 0
        %950 = vmatprep.subr.bf16.mxu0 0
        %951 = vmatpush1.bf16.msra.mxu0 0
        %952 = vmatprep.subr.bf16.mxu0 0
        %953 = vmatpush1.bf16.msra.mxu0 0
        %954 = vmatprep.subr.bf16.mxu0 0
        %955 = vmatpush1.bf16.msra.mxu0 0
        %956 = vmatprep.subr.bf16.mxu0 0
        %957 = vmatpush1.bf16.msra.mxu0 0
        %958 = vmatprep.subr.bf16.mxu0 0
        %959 = vmatpush1.bf16.msra.mxu0 0
        %960 = vmatprep.subr.bf16.mxu0 0
        %961 = vmatpush1.bf16.msra.mxu0 0
        %962 = vmatprep.subr.bf16.mxu0 0
        %963 = vmatpush1.bf16.msra.mxu0 0
        %964 = vmatprep.subr.bf16.mxu0 0
        %965 = vmatpush1.bf16.msra.mxu0 0
        %966 = vmatprep.subr.bf16.mxu0 0
        %967 = vmatpush1.bf16.msra.mxu0 0
        %968 = vmatprep.subr.bf16.mxu0 0
        %969 = vmatpush1.bf16.msra.mxu0 0
        %970 = vmatprep.subr.bf16.mxu0 0
        %971 = vmatpush1.bf16.msra.mxu0 0
        %972 = vmatprep.subr.bf16.mxu0 0
        %973 = vmatpush1.bf16.msra.mxu0 0
        %974 = vmatprep.mubr.bf16.mxu0 0
        %975 = vmatmul.mubr.bf16.gmra.mrb[0].mxu0 %v931
        %v976 = vpop.f32.mrb[0].mxu0
        %v977 = vadd.f32 0.0, %v976
        %v978 = vpop.f32.mrb[0].mxu0
        %v979 = vpop.f32.mrb[0].mxu0
        %v980 = vadd.f32 0.0, %v979
        %v981 = vpop.f32.mrb[0].mxu0
        %982 = vmatprep.mubr.bf16.mxu0 0
        %983 = vmatmul.mubr.bf16.gmra.mrb[0].mxu0 %v934
        %v984 = vpop.f32.mrb[0].mxu0
        %v985 = vadd.f32 0.0, %v984
        %v986 = vpop.f32.mrb[0].mxu0
        %v987 = vpop.f32.mrb[0].mxu0
        %v988 = vadd.f32 0.0, %v987
        %v989 = vpop.f32.mrb[0].mxu0
        %990 = vmatprep.mubr.bf16.mxu0 0
        %991 = vmatmul.mubr.bf16.gmra.mrb[0].mxu0 %v937
        %v992 = vpop.f32.mrb[0].mxu0
        %v993 = vadd.f32 0.0, %v992
        %v994 = vpop.f32.mrb[0].mxu0
        %v995 = vpop.f32.mrb[0].mxu0
        %v996 = vadd.f32 0.0, %v995
        %v997 = vpop.f32.mrb[0].mxu0
        %998 = vmatprep.mubr.bf16.mxu0 0
        %999 = vmatmul.mubr.bf16.gmra.mrb[0].mxu0 %v940
        %v1000 = vpop.f32.mrb[0].mxu0
        %v1001 = vadd.f32 0.0, %v1000
        %v1002 = vpop.f32.mrb[0].mxu0
        %v1003 = vpop.f32.mrb[0].mxu0
        %v1004 = vadd.f32 0.0, %v1003
        %v1005 = vpop.f32.mrb[0].mxu0
        %1006 = vdwg.mxu0
        %v1011 = vunpack.c.l.b16 %v892
        %v1012 = vunpack.c.l.b16 %v893
        %v1013 = vunpack.c.l.b16 %v894
        %v1014 = vunpack.c.l.b16 %v895
        %v1015 = vpack.c.b16 %v1012, %v1011
        %v1016 = vpack.c.b16 %v1014, %v1013
        %v1020 = vsel %vm848, %v871, 0
        %v1023 = vsel %vm848, %v872, 0
        %v1026 = vsel %vm848, %v873, 0
        %v1029 = vsel %vm848, %v874, 0
        %1031 = vmatprep.subr.bf16.mxu0 0
        %1032 = vmatpush1.bf16.msra.mxu0 %v1015
        %1033 = vmatprep.subr.bf16.mxu0 0
        %1034 = vmatpush1.bf16.msra.mxu0 %v1016
        %1035 = vmatprep.subr.bf16.mxu0 0
        %1036 = vmatpush1.bf16.msra.mxu0 0
        %1037 = vmatprep.subr.bf16.mxu0 0
        %1038 = vmatpush1.bf16.msra.mxu0 0
        %1039 = vmatprep.subr.bf16.mxu0 0
        %1040 = vmatpush1.bf16.msra.mxu0 0
        %1041 = vmatprep.subr.bf16.mxu0 0
        %1042 = vmatpush1.bf16.msra.mxu0 0
        %1043 = vmatprep.subr.bf16.mxu0 0
        %1044 = vmatpush1.bf16.msra.mxu0 0
        %1045 = vmatprep.subr.bf16.mxu0 0
        %1046 = vmatpush1.bf16.msra.mxu0 0
        %1047 = vmatprep.subr.bf16.mxu0 0
        %1048 = vmatpush1.bf16.msra.mxu0 0
        %1049 = vmatprep.subr.bf16.mxu0 0
        %1050 = vmatpush1.bf16.msra.mxu0 0
        %1051 = vmatprep.subr.bf16.mxu0 0
        %1052 = vmatpush1.bf16.msra.mxu0 0
        %1053 = vmatprep.subr.bf16.mxu0 0
        %1054 = vmatpush1.bf16.msra.mxu0 0
        %1055 = vmatprep.subr.bf16.mxu0 0
        %1056 = vmatpush1.bf16.msra.mxu0 0
        %1057 = vmatprep.subr.bf16.mxu0 0
        %1058 = vmatpush1.bf16.msra.mxu0 0
        %1059 = vmatprep.subr.bf16.mxu0 0
        %1060 = vmatpush1.bf16.msra.mxu0 0
        %1061 = vmatprep.subr.bf16.mxu0 0
        %1062 = vmatpush1.bf16.msra.mxu0 0
        %1063 = vmatprep.mubr.bf16.mxu0 0
        %1064 = vmatmul.mubr.bf16.gmra.mrb[0].mxu0 %v1020
        %v1065 = vpop.f32.mrb[0].mxu0
        %v1066 = vadd.f32 %v977, %v1065
        %v1067 = vpop.f32.mrb[0].mxu0
        %v1068 = vpop.f32.mrb[0].mxu0
        %v1069 = vadd.f32 %v980, %v1068
        %v1070 = vpop.f32.mrb[0].mxu0
        %1071 = vmatprep.mubr.bf16.mxu0 0
        %1072 = vmatmul.mubr.bf16.gmra.mrb[0].mxu0 %v1023
        %v1073 = vpop.f32.mrb[0].mxu0
        %v1074 = vadd.f32 %v985, %v1073
        %v1075 = vpop.f32.mrb[0].mxu0
        %v1076 = vpop.f32.mrb[0].mxu0
        %v1077 = vadd.f32 %v988, %v1076
        %v1078 = vpop.f32.mrb[0].mxu0
        %1079 = vmatprep.mubr.bf16.mxu0 0
        %1080 = vmatmul.mubr.bf16.gmra.mrb[0].mxu0 %v1026
        %v1081 = vpop.f32.mrb[0].mxu0
        %v1082 = vadd.f32 %v993, %v1081
        %v1083 = vpop.f32.mrb[0].mxu0
        %v1084 = vpop.f32.mrb[0].mxu0
        %v1085 = vadd.f32 %v996, %v1084
        %v1086 = vpop.f32.mrb[0].mxu0
        %1087 = vmatprep.mubr.bf16.mxu0 0
        %1088 = vmatmul.mubr.bf16.gmra.mrb[0].mxu0 %v1029
        %v1089 = vpop.f32.mrb[0].mxu0
        %v1090 = vadd.f32 %v1001, %v1089
        %v1091 = vpop.f32.mrb[0].mxu0
        %v1092 = vpop.f32.mrb[0].mxu0
        %v1093 = vadd.f32 %v1004, %v1092
        %v1094 = vpop.f32.mrb[0].mxu0
        %1095 = vdwg.mxu0
        %v1100 = vunpack.c.l.b16 %v900
        %v1101 = vunpack.c.l.b16 %v901
        %v1102 = vunpack.c.l.b16 %v902
        %v1103 = vunpack.c.l.b16 %v903
        %v1104 = vpack.c.b16 %v1101, %v1100
        %v1105 = vpack.c.b16 %v1103, %v1102
        %v1109 = vsel %vm848, %v885, 0
        %v1112 = vsel %vm848, %v886, 0
        %v1115 = vsel %vm848, %v887, 0
        %v1118 = vsel %vm848, %v888, 0
        %1120 = vmatprep.subr.bf16.mxu0 0
        %1121 = vmatpush1.bf16.msra.mxu0 %v1104
        %1122 = vmatprep.subr.bf16.mxu0 0
        %1123 = vmatpush1.bf16.msra.mxu0 %v1105
        %1124 = vmatprep.subr.bf16.mxu0 0
        %1125 = vmatpush1.bf16.msra.mxu0 0
        %1126 = vmatprep.subr.bf16.mxu0 0
        %1127 = vmatpush1.bf16.msra.mxu0 0
        %1128 = vmatprep.subr.bf16.mxu0 0
        %1129 = vmatpush1.bf16.msra.mxu0 0
        %1130 = vmatprep.subr.bf16.mxu0 0
        %1131 = vmatpush1.bf16.msra.mxu0 0
        %1132 = vmatprep.subr.bf16.mxu0 0
        %1133 = vmatpush1.bf16.msra.mxu0 0
        %1134 = vmatprep.subr.bf16.mxu0 0
        %1135 = vmatpush1.bf16.msra.mxu0 0
        %1136 = vmatprep.subr.bf16.mxu0 0
        %1137 = vmatpush1.bf16.msra.mxu0 0
        %1138 = vmatprep.subr.bf16.mxu0 0
        %1139 = vmatpush1.bf16.msra.mxu0 0
        %1140 = vmatprep.subr.bf16.mxu0 0
        %1141 = vmatpush1.bf16.msra.mxu0 0
        %1142 = vmatprep.subr.bf16.mxu0 0
        %1143 = vmatpush1.bf16.msra.mxu0 0
        %1144 = vmatprep.subr.bf16.mxu0 0
        %1145 = vmatpush1.bf16.msra.mxu0 0
        %1146 = vmatprep.subr.bf16.mxu0 0
        %1147 = vmatpush1.bf16.msra.mxu0 0
        %1148 = vmatprep.subr.bf16.mxu0 0
        %1149 = vmatpush1.bf16.msra.mxu0 0
        %1150 = vmatprep.subr.bf16.mxu0 0
        %1151 = vmatpush1.bf16.msra.mxu0 0
        %1152 = vmatprep.mubr.bf16.mxu0 0
        %1153 = vmatmul.mubr.bf16.gmra.mrb[0].mxu0 %v1109
        %v1154 = vpop.f32.mrb[0].mxu0
        %v1155 = vadd.f32 0.0, %v1154
        %v1156 = vpop.f32.mrb[0].mxu0
        %v1157 = vpop.f32.mrb[0].mxu0
        %v1158 = vadd.f32 0.0, %v1157
        %v1159 = vpop.f32.mrb[0].mxu0
        %1160 = vmatprep.mubr.bf16.mxu0 0
        %1161 = vmatmul.mubr.bf16.gmra.mrb[0].mxu0 %v1112
        %v1162 = vpop.f32.mrb[0].mxu0
        %v1163 = vadd.f32 0.0, %v1162
        %v1164 = vpop.f32.mrb[0].mxu0
        %v1165 = vpop.f32.mrb[0].mxu0
        %v1166 = vadd.f32 0.0, %v1165
        %v1167 = vpop.f32.mrb[0].mxu0
        %1168 = vmatprep.mubr.bf16.mxu0 0
        %1169 = vmatmul.mubr.bf16.gmra.mrb[0].mxu0 %v1115
        %v1170 = vpop.f32.mrb[0].mxu0
        %v1171 = vadd.f32 0.0, %v1170
        %v1172 = vpop.f32.mrb[0].mxu0
        %v1173 = vpop.f32.mrb[0].mxu0
        %v1174 = vadd.f32 0.0, %v1173
        %v1175 = vpop.f32.mrb[0].mxu0
        %1176 = vmatprep.mubr.bf16.mxu0 0
        %1177 = vmatmul.mubr.bf16.gmra.mrb[0].mxu0 %v1118
        %v1178 = vpop.f32.mrb[0].mxu0
        %v1179 = vadd.f32 0.0, %v1178
        %v1180 = vpop.f32.mrb[0].mxu0
        %v1181 = vpop.f32.mrb[0].mxu0
        %v1182 = vadd.f32 0.0, %v1181
        %v1183 = vpop.f32.mrb[0].mxu0
        %1184 = vdwg.mxu0
        %v1185 = vadd.f32 %v1066, %v1155
        %v1186 = vadd.f32 %v1069, %v1158
        %v1187 = vadd.f32 %v1074, %v1163
        %v1188 = vadd.f32 %v1077, %v1166
        %v1189 = vadd.f32 %v1082, %v1171
        %v1190 = vadd.f32 %v1085, %v1174
        %v1191 = vadd.f32 %v1090, %v1179
        %v1192 = vadd.f32 %v1093, %v1182
        %s1193 = scalar_lea.vmem [#allocation17], %s51
        %v1194 = vld [vmem:[%s1193] sm:$0x1]
        %v1196 = vlaneseq
        %v1197 = vshrl.u32 %v1196, 7
        %v1198 = vsub.s32 0, %v1197
        %v1199 = vrot.slane %v1194, %v1198
        %v1201 = vadd.f32 %v1185, %v1199
        %v1202 = vadd.f32 %v1186, %v1199
        %v1203 = vadd.f32 %v1187, %v1199
        %v1204 = vadd.f32 %v1188, %v1199
        %v1205 = vadd.f32 %v1189, %v1199
        %v1206 = vadd.f32 %v1190, %v1199
        %v1207 = vadd.f32 %v1191, %v1199
        %v1208 = vadd.f32 %v1192, %v1199
        %v1213 = vunpack.c.l.b16 %v910
        %v1214 = vunpack.c.l.b16 %v911
        %v1215 = vunpack.c.l.b16 %v912
        %v1216 = vunpack.c.l.b16 %v913
        %v1217 = vpack.c.b16 %v1214, %v1213
        %v1218 = vpack.c.b16 %v1216, %v1215
        %1221 = vmatprep.subr.bf16.mxu0 0
        %1222 = vmatpush1.bf16.msra.mxu0 %v1217
        %1223 = vmatprep.subr.bf16.mxu0 0
        %1224 = vmatpush1.bf16.msra.mxu0 %v1218
        %1225 = vmatprep.subr.bf16.mxu0 0
        %1226 = vmatpush1.bf16.msra.mxu0 0
        %1227 = vmatprep.subr.bf16.mxu0 0
        %1228 = vmatpush1.bf16.msra.mxu0 0
        %1229 = vmatprep.subr.bf16.mxu0 0
        %1230 = vmatpush1.bf16.msra.mxu0 0
        %1231 = vmatprep.subr.bf16.mxu0 0
        %1232 = vmatpush1.bf16.msra.mxu0 0
        %1233 = vmatprep.subr.bf16.mxu0 0
        %1234 = vmatpush1.bf16.msra.mxu0 0
        %1235 = vmatprep.subr.bf16.mxu0 0
        %1236 = vmatpush1.bf16.msra.mxu0 0
        %1237 = vmatprep.subr.bf16.mxu0 0
        %1238 = vmatpush1.bf16.msra.mxu0 0
        %1239 = vmatprep.subr.bf16.mxu0 0
        %1240 = vmatpush1.bf16.msra.mxu0 0
        %1241 = vmatprep.subr.bf16.mxu0 0
        %1242 = vmatpush1.bf16.msra.mxu0 0
        %1243 = vmatprep.subr.bf16.mxu0 0
        %1244 = vmatpush1.bf16.msra.mxu0 0
        %1245 = vmatprep.subr.bf16.mxu0 0
        %1246 = vmatpush1.bf16.msra.mxu0 0
        %1247 = vmatprep.subr.bf16.mxu0 0
        %1248 = vmatpush1.bf16.msra.mxu0 0
        %1249 = vmatprep.subr.bf16.mxu0 0
        %1250 = vmatpush1.bf16.msra.mxu0 0
        %1251 = vmatprep.subr.bf16.mxu0 0
        %1252 = vmatpush1.bf16.msra.mxu0 0
        %1253 = vmatprep.mubr.bf16.mxu0 0
        %1254 = vmatmul.mubr.bf16.gmra.mrb[0].mxu0 %v931
        %v1255 = vpop.f32.mrb[0].mxu0
        %v1256 = vadd.f32 0.0, %v1255
        %v1257 = vpop.f32.mrb[0].mxu0
        %v1258 = vpop.f32.mrb[0].mxu0
        %v1259 = vadd.f32 0.0, %v1258
        %v1260 = vpop.f32.mrb[0].mxu0
        %1261 = vmatprep.mubr.bf16.mxu0 0
        %1262 = vmatmul.mubr.bf16.gmra.mrb[0].mxu0 %v934
        %v1263 = vpop.f32.mrb[0].mxu0
        %v1264 = vadd.f32 0.0, %v1263
        %v1265 = vpop.f32.mrb[0].mxu0
        %v1266 = vpop.f32.mrb[0].mxu0
        %v1267 = vadd.f32 0.0, %v1266
        %v1268 = vpop.f32.mrb[0].mxu0
        %1269 = vmatprep.mubr.bf16.mxu0 0
        %1270 = vmatmul.mubr.bf16.gmra.mrb[0].mxu0 %v937
        %v1271 = vpop.f32.mrb[0].mxu0
        %v1272 = vadd.f32 0.0, %v1271
        %v1273 = vpop.f32.mrb[0].mxu0
        %v1274 = vpop.f32.mrb[0].mxu0
        %v1275 = vadd.f32 0.0, %v1274
        %v1276 = vpop.f32.mrb[0].mxu0
        %1277 = vmatprep.mubr.bf16.mxu0 0
        %1278 = vmatmul.mubr.bf16.gmra.mrb[0].mxu0 %v940
        %v1279 = vpop.f32.mrb[0].mxu0
        %v1280 = vadd.f32 0.0, %v1279
        %v1281 = vpop.f32.mrb[0].mxu0
        %v1282 = vpop.f32.mrb[0].mxu0
        %v1283 = vadd.f32 0.0, %v1282
        %v1284 = vpop.f32.mrb[0].mxu0
        %1285 = vdwg.mxu0
        %v1290 = vunpack.c.l.b16 %v906
        %v1291 = vunpack.c.l.b16 %v907
        %v1292 = vunpack.c.l.b16 %v908
        %v1293 = vunpack.c.l.b16 %v909
        %v1294 = vpack.c.b16 %v1291, %v1290
        %v1295 = vpack.c.b16 %v1293, %v1292
        %1298 = vmatprep.subr.bf16.mxu0 0
        %1299 = vmatpush1.bf16.msra.mxu0 %v1294
        %1300 = vmatprep.subr.bf16.mxu0 0
        %1301 = vmatpush1.bf16.msra.mxu0 %v1295
        %1302 = vmatprep.subr.bf16.mxu0 0
        %1303 = vmatpush1.bf16.msra.mxu0 0
        %1304 = vmatprep.subr.bf16.mxu0 0
        %1305 = vmatpush1.bf16.msra.mxu0 0
        %1306 = vmatprep.subr.bf16.mxu0 0
        %1307 = vmatpush1.bf16.msra.mxu0 0
        %1308 = vmatprep.subr.bf16.mxu0 0
        %1309 = vmatpush1.bf16.msra.mxu0 0
        %1310 = vmatprep.subr.bf16.mxu0 0
        %1311 = vmatpush1.bf16.msra.mxu0 0
        %1312 = vmatprep.subr.bf16.mxu0 0
        %1313 = vmatpush1.bf16.msra.mxu0 0
        %1314 = vmatprep.subr.bf16.mxu0 0
        %1315 = vmatpush1.bf16.msra.mxu0 0
        %1316 = vmatprep.subr.bf16.mxu0 0
        %1317 = vmatpush1.bf16.msra.mxu0 0
        %1318 = vmatprep.subr.bf16.mxu0 0
        %1319 = vmatpush1.bf16.msra.mxu0 0
        %1320 = vmatprep.subr.bf16.mxu0 0
        %1321 = vmatpush1.bf16.msra.mxu0 0
        %1322 = vmatprep.subr.bf16.mxu0 0
        %1323 = vmatpush1.bf16.msra.mxu0 0
        %1324 = vmatprep.subr.bf16.mxu0 0
        %1325 = vmatpush1.bf16.msra.mxu0 0
        %1326 = vmatprep.subr.bf16.mxu0 0
        %1327 = vmatpush1.bf16.msra.mxu0 0
        %1328 = vmatprep.subr.bf16.mxu0 0
        %1329 = vmatpush1.bf16.msra.mxu0 0
        %1330 = vmatprep.mubr.bf16.mxu0 0
        %1331 = vmatmul.mubr.bf16.gmra.mrb[0].mxu0 %v1020
        %v1332 = vpop.f32.mrb[0].mxu0
        %v1333 = vadd.f32 %v1256, %v1332
        %v1334 = vpop.f32.mrb[0].mxu0
        %v1335 = vpop.f32.mrb[0].mxu0
        %v1336 = vadd.f32 %v1259, %v1335
        %v1337 = vpop.f32.mrb[0].mxu0
        %1338 = vmatprep.mubr.bf16.mxu0 0
        %1339 = vmatmul.mubr.bf16.gmra.mrb[0].mxu0 %v1023
        %v1340 = vpop.f32.mrb[0].mxu0
        %v1341 = vadd.f32 %v1264, %v1340
        %v1342 = vpop.f32.mrb[0].mxu0
        %v1343 = vpop.f32.mrb[0].mxu0
        %v1344 = vadd.f32 %v1267, %v1343
        %v1345 = vpop.f32.mrb[0].mxu0
        %1346 = vmatprep.mubr.bf16.mxu0 0
        %1347 = vmatmul.mubr.bf16.gmra.mrb[0].mxu0 %v1026
        %v1348 = vpop.f32.mrb[0].mxu0
        %v1349 = vadd.f32 %v1272, %v1348
        %v1350 = vpop.f32.mrb[0].mxu0
        %v1351 = vpop.f32.mrb[0].mxu0
        %v1352 = vadd.f32 %v1275, %v1351
        %v1353 = vpop.f32.mrb[0].mxu0
        %1354 = vmatprep.mubr.bf16.mxu0 0
        %1355 = vmatmul.mubr.bf16.gmra.mrb[0].mxu0 %v1029
        %v1356 = vpop.f32.mrb[0].mxu0
        %v1357 = vadd.f32 %v1280, %v1356
        %v1358 = vpop.f32.mrb[0].mxu0
        %v1359 = vpop.f32.mrb[0].mxu0
        %v1360 = vadd.f32 %v1283, %v1359
        %v1361 = vpop.f32.mrb[0].mxu0
        %1362 = vdwg.mxu0
        %v1367 = vunpack.c.l.b16 %v914
        %v1368 = vunpack.c.l.b16 %v915
        %v1369 = vunpack.c.l.b16 %v916
        %v1370 = vunpack.c.l.b16 %v917
        %v1371 = vpack.c.b16 %v1368, %v1367
        %v1372 = vpack.c.b16 %v1370, %v1369
        %1375 = vmatprep.subr.bf16.mxu0 0
        %1376 = vmatpush1.bf16.msra.mxu0 %v1371
        %1377 = vmatprep.subr.bf16.mxu0 0
        %1378 = vmatpush1.bf16.msra.mxu0 %v1372
        %1379 = vmatprep.subr.bf16.mxu0 0
        %1380 = vmatpush1.bf16.msra.mxu0 0
        %1381 = vmatprep.subr.bf16.mxu0 0
        %1382 = vmatpush1.bf16.msra.mxu0 0
        %1383 = vmatprep.subr.bf16.mxu0 0
        %1384 = vmatpush1.bf16.msra.mxu0 0
        %1385 = vmatprep.subr.bf16.mxu0 0
        %1386 = vmatpush1.bf16.msra.mxu0 0
        %1387 = vmatprep.subr.bf16.mxu0 0
        %1388 = vmatpush1.bf16.msra.mxu0 0
        %1389 = vmatprep.subr.bf16.mxu0 0
        %1390 = vmatpush1.bf16.msra.mxu0 0
        %1391 = vmatprep.subr.bf16.mxu0 0
        %1392 = vmatpush1.bf16.msra.mxu0 0
        %1393 = vmatprep.subr.bf16.mxu0 0
        %1394 = vmatpush1.bf16.msra.mxu0 0
        %1395 = vmatprep.subr.bf16.mxu0 0
        %1396 = vmatpush1.bf16.msra.mxu0 0
        %1397 = vmatprep.subr.bf16.mxu0 0
        %1398 = vmatpush1.bf16.msra.mxu0 0
        %1399 = vmatprep.subr.bf16.mxu0 0
        %1400 = vmatpush1.bf16.msra.mxu0 0
        %1401 = vmatprep.subr.bf16.mxu0 0
        %1402 = vmatpush1.bf16.msra.mxu0 0
        %1403 = vmatprep.subr.bf16.mxu0 0
        %1404 = vmatpush1.bf16.msra.mxu0 0
        %1405 = vmatprep.subr.bf16.mxu0 0
        %1406 = vmatpush1.bf16.msra.mxu0 0
        %1407 = vmatprep.mubr.bf16.mxu0 0
        %1408 = vmatmul.mubr.bf16.gmra.mrb[0].mxu0 %v1109
        %v1409 = vpop.f32.mrb[0].mxu0
        %v1410 = vadd.f32 0.0, %v1409
        %v1411 = vpop.f32.mrb[0].mxu0
        %v1412 = vpop.f32.mrb[0].mxu0
        %v1413 = vadd.f32 0.0, %v1412
        %v1414 = vpop.f32.mrb[0].mxu0
        %1415 = vmatprep.mubr.bf16.mxu0 0
        %1416 = vmatmul.mubr.bf16.gmra.mrb[0].mxu0 %v1112
        %v1417 = vpop.f32.mrb[0].mxu0
        %v1418 = vadd.f32 0.0, %v1417
        %v1419 = vpop.f32.mrb[0].mxu0
        %v1420 = vpop.f32.mrb[0].mxu0
        %v1421 = vadd.f32 0.0, %v1420
        %v1422 = vpop.f32.mrb[0].mxu0
        %1423 = vmatprep.mubr.bf16.mxu0 0
        %1424 = vmatmul.mubr.bf16.gmra.mrb[0].mxu0 %v1115
        %v1425 = vpop.f32.mrb[0].mxu0
        %v1426 = vadd.f32 0.0, %v1425
        %v1427 = vpop.f32.mrb[0].mxu0
        %v1428 = vpop.f32.mrb[0].mxu0
        %v1429 = vadd.f32 0.0, %v1428
        %v1430 = vpop.f32.mrb[0].mxu0
        %1431 = vmatprep.mubr.bf16.mxu0 0
        %1432 = vmatmul.mubr.bf16.gmra.mrb[0].mxu0 %v1118
        %v1433 = vpop.f32.mrb[0].mxu0
        %v1434 = vadd.f32 0.0, %v1433
        %v1435 = vpop.f32.mrb[0].mxu0
        %v1436 = vpop.f32.mrb[0].mxu0
        %v1437 = vadd.f32 0.0, %v1436
        %v1438 = vpop.f32.mrb[0].mxu0
        %1439 = vdwg.mxu0
        %v1440 = vadd.f32 %v1333, %v1410
        %v1441 = vadd.f32 %v1336, %v1413
        %v1442 = vadd.f32 %v1341, %v1418
        %v1443 = vadd.f32 %v1344, %v1421
        %v1444 = vadd.f32 %v1349, %v1426
        %v1445 = vadd.f32 %v1352, %v1429
        %v1446 = vadd.f32 %v1357, %v1434
        %v1447 = vadd.f32 %v1360, %v1437
        %s1448 = scalar_lea.vmem [#allocation20], %s51
        %v1449 = vld [vmem:[%s1448] sm:$0x1]
        %v1451 = vlaneseq
        %v1452 = vshrl.u32 %v1451, 7
        %v1453 = vsub.s32 0, %v1452
        %v1454 = vrot.slane %v1449, %v1453
        %v1456 = vadd.f32 %v1440, %v1454
        %v1457 = vadd.f32 %v1441, %v1454
        %v1458 = vadd.f32 %v1442, %v1454
        %v1459 = vadd.f32 %v1443, %v1454
        %v1460 = vadd.f32 %v1444, %v1454
        %v1461 = vadd.f32 %v1445, %v1454
        %v1462 = vadd.f32 %v1446, %v1454
        %v1463 = vadd.f32 %v1447, %v1454
        %v1464 = vxor.u32 %v1201, 2147483648
        %v1465 = vxor.u32 %v1202, 2147483648
        %v1466 = vxor.u32 %v1203, 2147483648
        %v1467 = vxor.u32 %v1204, 2147483648
        %v1468 = vxor.u32 %v1205, 2147483648
        %v1469 = vxor.u32 %v1206, 2147483648
        %v1470 = vxor.u32 %v1207, 2147483648
        %v1471 = vxor.u32 %v1208, 2147483648
        %v1472 = vmul.f32 %v1464, 1.442695
        %v1473 = vpow.pop %v1472
        %v1474 = vmul.f32 %v1465, 1.442695
        %v1475 = vpow.pop %v1474
        %v1476 = vmul.f32 %v1466, 1.442695
        %v1477 = vpow.pop %v1476
        %v1478 = vmul.f32 %v1467, 1.442695
        %v1479 = vpow.pop %v1478
        %v1480 = vmul.f32 %v1468, 1.442695
        %v1481 = vpow.pop %v1480
        %v1482 = vmul.f32 %v1469, 1.442695
        %v1483 = vpow.pop %v1482
        %v1484 = vmul.f32 %v1470, 1.442695
        %v1485 = vpow.pop %v1484
        %v1486 = vmul.f32 %v1471, 1.442695
        %v1487 = vpow.pop %v1486
        %v1488 = vadd.f32 %v1473, 1.0
        %v1489 = vadd.f32 %v1475, 1.0
        %v1490 = vadd.f32 %v1477, 1.0
        %v1491 = vadd.f32 %v1479, 1.0
        %v1492 = vadd.f32 %v1481, 1.0
        %v1493 = vadd.f32 %v1483, 1.0
        %v1494 = vadd.f32 %v1485, 1.0
        %v1495 = vadd.f32 %v1487, 1.0
        %v1496 = vrcp.pop %v1488
        %v1497 = vmul.f32 1.0, %v1496
        %v1498 = vrcp.pop %v1489
        %v1499 = vmul.f32 1.0, %v1498
        %v1500 = vrcp.pop %v1490
        %v1501 = vmul.f32 1.0, %v1500
        %v1502 = vrcp.pop %v1491
        %v1503 = vmul.f32 1.0, %v1502
        %v1504 = vrcp.pop %v1492
        %v1505 = vmul.f32 1.0, %v1504
        %v1506 = vrcp.pop %v1493
        %v1507 = vmul.f32 1.0, %v1506
        %v1508 = vrcp.pop %v1494
        %v1509 = vmul.f32 1.0, %v1508
        %v1510 = vrcp.pop %v1495
        %v1511 = vmul.f32 1.0, %v1510
        %v1512 = vtanh.pop %v1456
        %v1513 = vtanh.pop %v1457
        %v1514 = vtanh.pop %v1458
        %v1515 = vtanh.pop %v1459
        %v1516 = vtanh.pop %v1460
        %v1517 = vtanh.pop %v1461
        %v1518 = vtanh.pop %v1462
        %v1519 = vtanh.pop %v1463
        %v1520 = vmul.f32 %v1497, %v1512
        %v1521 = vmul.f32 %v1499, %v1513
        %v1522 = vmul.f32 %v1501, %v1514
        %v1523 = vmul.f32 %v1503, %v1515
        %v1524 = vmul.f32 %v1505, %v1516
        %v1525 = vmul.f32 %v1507, %v1517
        %v1526 = vmul.f32 %v1509, %v1518
        %v1527 = vmul.f32 %v1511, %v1519
        %vm1528 = vcmp.gt.f32.partialorder %v1520, 0.5
        %vm1529 = vcmp.gt.f32.partialorder %v1521, 0.5
        %vm1530 = vcmp.gt.f32.partialorder %v1522, 0.5
        %vm1531 = vcmp.gt.f32.partialorder %v1523, 0.5
        %vm1532 = vcmp.gt.f32.partialorder %v1524, 0.5
        %vm1533 = vcmp.gt.f32.partialorder %v1525, 0.5
        %vm1534 = vcmp.gt.f32.partialorder %v1526, 0.5
        %vm1535 = vcmp.gt.f32.partialorder %v1527, 0.5
        %v1536 = vsel %vm1528, 1, 0
        %v1537 = vsel %vm1529, 1, 0
        %v1538 = vsel %vm1530, 1, 0
        %v1539 = vsel %vm1531, 1, 0
        %v1540 = vsel %vm1532, 1, 0
        %v1541 = vsel %vm1533, 1, 0
        %v1542 = vsel %vm1534, 1, 0
        %v1543 = vsel %vm1535, 1, 0
        %v1544 = vcvt.s32.f32 %v1536
        %v1545 = vcvt.s32.f32 %v1537
        %v1546 = vcvt.s32.f32 %v1538
        %v1547 = vcvt.s32.f32 %v1539
        %v1548 = vcvt.s32.f32 %v1540
        %v1549 = vcvt.s32.f32 %v1541
        %v1550 = vcvt.s32.f32 %v1542
        %v1551 = vcvt.s32.f32 %v1543
        %v1552 = vpack.c.bf16 %v1545, %v1544
        %v1553 = vpack.c.bf16 %v1547, %v1546
        %v1554 = vpack.c.bf16 %v1549, %v1548
        %v1555 = vpack.c.bf16 %v1551, %v1550
        %s1556 = smul.u32 %s51, 4
        %s1557 = smul.addr %s1556, 4
        %s1558 = scalar_lea.vmem [#allocation22], %s1557
        %v1559 = vld [vmem:[%s1558] sm:$0xf]
        %v1560 = vld [vmem:[%s1558 + $0x4] sm:$0xf]
        %v1561 = vld [vmem:[%s1558 + $0x8] sm:$0xf]
        %v1562 = vld [vmem:[%s1558 + $0xc] sm:$0xf]
        %s1563 = scalar_lea.vmem [#allocation23], %s51
        %v1564 = vld [vmem:[%s1563] sm:$0x1]
        %v1566 = vlaneseq
        %v1567 = vshrl.u32 %v1566, 7
        %v1568 = vsub.s32 0, %v1567
        %v1569 = vrot.slane %v1564, %v1568
        %v1575 = vunpack.c.l.b16 %v1559
        %v1576 = vunpack.c.l.b16 %v1560
        %v1577 = vunpack.c.l.b16 %v1561
        %v1578 = vunpack.c.l.b16 %v1562
        %v1579 = vpack.c.b16 %v1576, %v1575
        %v1580 = vpack.c.b16 %v1578, %v1577
        %v1584 = vsel %vm848, %v1552, 0
        %v1587 = vsel %vm848, %v1553, 0
        %v1590 = vsel %vm848, %v1554, 0
        %v1593 = vsel %vm848, %v1555, 0
        %1595 = vmatprep.subr.bf16.mxu0 0
        %1596 = vmatpush1.bf16.msra.mxu0 %v1579
        %1597 = vmatprep.subr.bf16.mxu0 0
        %1598 = vmatpush1.bf16.msra.mxu0 %v1580
        %1599 = vmatprep.subr.bf16.mxu0 0
        %1600 = vmatpush1.bf16.msra.mxu0 0
        %1601 = vmatprep.subr.bf16.mxu0 0
        %1602 = vmatpush1.bf16.msra.mxu0 0
        %1603 = vmatprep.subr.bf16.mxu0 0
        %1604 = vmatpush1.bf16.msra.mxu0 0
        %1605 = vmatprep.subr.bf16.mxu0 0
        %1606 = vmatpush1.bf16.msra.mxu0 0
        %1607 = vmatprep.subr.bf16.mxu0 0
        %1608 = vmatpush1.bf16.msra.mxu0 0
        %1609 = vmatprep.subr.bf16.mxu0 0
        %1610 = vmatpush1.bf16.msra.mxu0 0
        %1611 = vmatprep.subr.bf16.mxu0 0
        %1612 = vmatpush1.bf16.msra.mxu0 0
        %1613 = vmatprep.subr.bf16.mxu0 0
        %1614 = vmatpush1.bf16.msra.mxu0 0
        %1615 = vmatprep.subr.bf16.mxu0 0
        %1616 = vmatpush1.bf16.msra.mxu0 0
        %1617 = vmatprep.subr.bf16.mxu0 0
        %1618 = vmatpush1.bf16.msra.mxu0 0
        %1619 = vmatprep.subr.bf16.mxu0 0
        %1620 = vmatpush1.bf16.msra.mxu0 0
        %1621 = vmatprep.subr.bf16.mxu0 0
        %1622 = vmatpush1.bf16.msra.mxu0 0
        %1623 = vmatprep.subr.bf16.mxu0 0
        %1624 = vmatpush1.bf16.msra.mxu0 0
        %1625 = vmatprep.subr.bf16.mxu0 0
        %1626 = vmatpush1.bf16.msra.mxu0 0
        %1627 = vmatprep.mubr.bf16.mxu0 0
        %1628 = vmatmul.mubr.bf16.gmra.mrb[0].mxu0 %v1584
        %v1629 = vpop.f32.mrb[0].mxu0
        %v1630 = vadd.f32 %v1569, %v1629
        %v1631 = vpop.f32.mrb[0].mxu0
        %v1632 = vpop.f32.mrb[0].mxu0
        %v1633 = vadd.f32 %v1569, %v1632
        %v1634 = vpop.f32.mrb[0].mxu0
        %1635 = vmatprep.mubr.bf16.mxu0 0
        %1636 = vmatmul.mubr.bf16.gmra.mrb[0].mxu0 %v1587
        %v1637 = vpop.f32.mrb[0].mxu0
        %v1638 = vadd.f32 %v1569, %v1637
        %v1639 = vpop.f32.mrb[0].mxu0
        %v1640 = vpop.f32.mrb[0].mxu0
        %v1641 = vadd.f32 %v1569, %v1640
        %v1642 = vpop.f32.mrb[0].mxu0
        %1643 = vmatprep.mubr.bf16.mxu0 0
        %1644 = vmatmul.mubr.bf16.gmra.mrb[0].mxu0 %v1590
        %v1645 = vpop.f32.mrb[0].mxu0
        %v1646 = vadd.f32 %v1569, %v1645
        %v1647 = vpop.f32.mrb[0].mxu0
        %v1648 = vpop.f32.mrb[0].mxu0
        %v1649 = vadd.f32 %v1569, %v1648
        %v1650 = vpop.f32.mrb[0].mxu0
        %1651 = vmatprep.mubr.bf16.mxu0 0
        %1652 = vmatmul.mubr.bf16.gmra.mrb[0].mxu0 %v1593
        %v1653 = vpop.f32.mrb[0].mxu0
        %v1654 = vadd.f32 %v1569, %v1653
        %v1655 = vpop.f32.mrb[0].mxu0
        %v1656 = vpop.f32.mrb[0].mxu0
        %v1657 = vadd.f32 %v1569, %v1656
        %v1658 = vpop.f32.mrb[0].mxu0
        %1659 = vdwg.mxu0
        %s1660 = smul.addr %s1556, 4
        %s1661 = scalar_lea.vmem [#allocation25], %s1660
        %v1662 = vld [vmem:[%s1661] sm:$0xf]
        %v1663 = vld [vmem:[%s1661 + $0x4] sm:$0xf]
        %v1664 = vld [vmem:[%s1661 + $0x8] sm:$0xf]
        %v1665 = vld [vmem:[%s1661 + $0xc] sm:$0xf]
        %s1666 = scalar_lea.vmem [#allocation26], %s51
        %v1667 = vld [vmem:[%s1666] sm:$0x1]
        %v1669 = vlaneseq
        %v1670 = vshrl.u32 %v1669, 7
        %v1671 = vsub.s32 0, %v1670
        %v1672 = vrot.slane %v1667, %v1671
        %v1678 = vunpack.c.l.b16 %v1662
        %v1679 = vunpack.c.l.b16 %v1663
        %v1680 = vunpack.c.l.b16 %v1664
        %v1681 = vunpack.c.l.b16 %v1665
        %v1682 = vpack.c.b16 %v1679, %v1678
        %v1683 = vpack.c.b16 %v1681, %v1680
        %1686 = vmatprep.subr.bf16.mxu0 0
        %1687 = vmatpush1.bf16.msra.mxu0 %v1682
        %1688 = vmatprep.subr.bf16.mxu0 0
        %1689 = vmatpush1.bf16.msra.mxu0 %v1683
        %1690 = vmatprep.subr.bf16.mxu0 0
        %1691 = vmatpush1.bf16.msra.mxu0 0
        %1692 = vmatprep.subr.bf16.mxu0 0
        %1693 = vmatpush1.bf16.msra.mxu0 0
        %1694 = vmatprep.subr.bf16.mxu0 0
        %1695 = vmatpush1.bf16.msra.mxu0 0
        %1696 = vmatprep.subr.bf16.mxu0 0
        %1697 = vmatpush1.bf16.msra.mxu0 0
        %1698 = vmatprep.subr.bf16.mxu0 0
        %1699 = vmatpush1.bf16.msra.mxu0 0
        %1700 = vmatprep.subr.bf16.mxu0 0
        %1701 = vmatpush1.bf16.msra.mxu0 0
        %1702 = vmatprep.subr.bf16.mxu0 0
        %1703 = vmatpush1.bf16.msra.mxu0 0
        %1704 = vmatprep.subr.bf16.mxu0 0
        %1705 = vmatpush1.bf16.msra.mxu0 0
        %1706 = vmatprep.subr.bf16.mxu0 0
        %1707 = vmatpush1.bf16.msra.mxu0 0
        %1708 = vmatprep.subr.bf16.mxu0 0
        %1709 = vmatpush1.bf16.msra.mxu0 0
        %1710 = vmatprep.subr.bf16.mxu0 0
        %1711 = vmatpush1.bf16.msra.mxu0 0
        %1712 = vmatprep.subr.bf16.mxu0 0
        %1713 = vmatpush1.bf16.msra.mxu0 0
        %1714 = vmatprep.subr.bf16.mxu0 0
        %1715 = vmatpush1.bf16.msra.mxu0 0
        %1716 = vmatprep.subr.bf16.mxu0 0
        %1717 = vmatpush1.bf16.msra.mxu0 0
        %1718 = vmatprep.mubr.bf16.mxu0 0
        %1719 = vmatmul.mubr.bf16.gmra.mrb[0].mxu0 %v1584
        %v1720 = vpop.f32.mrb[0].mxu0
        %v1721 = vadd.f32 %v1672, %v1720
        %v1722 = vpop.f32.mrb[0].mxu0
        %v1723 = vpop.f32.mrb[0].mxu0
        %v1724 = vadd.f32 %v1672, %v1723
        %v1725 = vpop.f32.mrb[0].mxu0
        %1726 = vmatprep.mubr.bf16.mxu0 0
        %1727 = vmatmul.mubr.bf16.gmra.mrb[0].mxu0 %v1587
        %v1728 = vpop.f32.mrb[0].mxu0
        %v1729 = vadd.f32 %v1672, %v1728
        %v1730 = vpop.f32.mrb[0].mxu0
        %v1731 = vpop.f32.mrb[0].mxu0
        %v1732 = vadd.f32 %v1672, %v1731
        %v1733 = vpop.f32.mrb[0].mxu0
        %1734 = vmatprep.mubr.bf16.mxu0 0
        %1735 = vmatmul.mubr.bf16.gmra.mrb[0].mxu0 %v1590
        %v1736 = vpop.f32.mrb[0].mxu0
        %v1737 = vadd.f32 %v1672, %v1736
        %v1738 = vpop.f32.mrb[0].mxu0
        %v1739 = vpop.f32.mrb[0].mxu0
        %v1740 = vadd.f32 %v1672, %v1739
        %v1741 = vpop.f32.mrb[0].mxu0
        %1742 = vmatprep.mubr.bf16.mxu0 0
        %1743 = vmatmul.mubr.bf16.gmra.mrb[0].mxu0 %v1593
        %v1744 = vpop.f32.mrb[0].mxu0
        %v1745 = vadd.f32 %v1672, %v1744
        %v1746 = vpop.f32.mrb[0].mxu0
        %v1747 = vpop.f32.mrb[0].mxu0
        %v1748 = vadd.f32 %v1672, %v1747
        %v1749 = vpop.f32.mrb[0].mxu0
        %1750 = vdwg.mxu0
        %v1751 = vadd.f32 %v824, %v1630
        %v1752 = vadd.f32 %v825, %v1633
        %v1753 = vadd.f32 %v826, %v1638
        %v1754 = vadd.f32 %v827, %v1641
        %v1755 = vadd.f32 %v828, %v1646
        %v1756 = vadd.f32 %v829, %v1649
        %v1757 = vadd.f32 %v830, %v1654
        %v1758 = vadd.f32 %v831, %v1657
        %1759 = vst.msk [vmem:[#allocation2] sm:$0xff] %vm848, %v1751
        %1760 = vst.msk [vmem:[#allocation2 + $0x8] sm:$0xff] %vm848, %v1752
        %1761 = vst.msk [vmem:[#allocation2 + $0x10] sm:$0xff] %vm848, %v1753
        %1762 = vst.msk [vmem:[#allocation2 + $0x18] sm:$0xff] %vm848, %v1754
        %1763 = vst.msk [vmem:[#allocation2 + $0x20] sm:$0xff] %vm848, %v1755
        %1764 = vst.msk [vmem:[#allocation2 + $0x28] sm:$0xff] %vm848, %v1756
        %1765 = vst.msk [vmem:[#allocation2 + $0x30] sm:$0xff] %vm848, %v1757
        %1766 = vst.msk [vmem:[#allocation2 + $0x38] sm:$0xff] %vm848, %v1758
        %v1767 = vld [vmem:[#allocation3] sm:$0xff]
        %v1768 = vld [vmem:[#allocation3 + $0x8] sm:$0xff]
        %v1769 = vld [vmem:[#allocation3 + $0x10] sm:$0xff]
        %v1770 = vld [vmem:[#allocation3 + $0x18] sm:$0xff]
        %v1771 = vld [vmem:[#allocation3 + $0x20] sm:$0xff]
        %v1772 = vld [vmem:[#allocation3 + $0x28] sm:$0xff]
        %v1773 = vld [vmem:[#allocation3 + $0x30] sm:$0xff]
        %v1774 = vld [vmem:[#allocation3 + $0x38] sm:$0xff]
        %vm1775 = vcmp.gt.f32.partialorder %v1721, 0.5
        %vm1776 = vcmp.gt.f32.partialorder %v1724, 0.5
        %vm1777 = vcmp.gt.f32.partialorder %v1729, 0.5
        %vm1778 = vcmp.gt.f32.partialorder %v1732, 0.5
        %vm1779 = vcmp.gt.f32.partialorder %v1737, 0.5
        %vm1780 = vcmp.gt.f32.partialorder %v1740, 0.5
        %vm1781 = vcmp.gt.f32.partialorder %v1745, 0.5
        %vm1782 = vcmp.gt.f32.partialorder %v1748, 0.5
        %v1783 = vsel %vm1775, 1, 0
        %v1784 = vsel %vm1776, 1, 0
        %v1785 = vsel %vm1777, 1, 0
        %v1786 = vsel %vm1778, 1, 0
        %v1787 = vsel %vm1779, 1, 0
        %v1788 = vsel %vm1780, 1, 0
        %v1789 = vsel %vm1781, 1, 0
        %v1790 = vsel %vm1782, 1, 0
        %v1791 = vcvt.s32.f32 %v1783
        %v1792 = vcvt.s32.f32 %v1784
        %v1793 = vcvt.s32.f32 %v1785
        %v1794 = vcvt.s32.f32 %v1786
        %v1795 = vcvt.s32.f32 %v1787
        %v1796 = vcvt.s32.f32 %v1788
        %v1797 = vcvt.s32.f32 %v1789
        %v1798 = vcvt.s32.f32 %v1790
        %v1799 = vadd.f32 %v1767, %v1791
        %v1800 = vadd.f32 %v1768, %v1792
        %v1801 = vadd.f32 %v1769, %v1793
        %v1802 = vadd.f32 %v1770, %v1794
        %v1803 = vadd.f32 %v1771, %v1795
        %v1804 = vadd.f32 %v1772, %v1796
        %v1805 = vadd.f32 %v1773, %v1797
        %v1806 = vadd.f32 %v1774, %v1798
        %1807 = vst.msk [vmem:[#allocation3] sm:$0xff] %vm848, %v1799
        %1808 = vst.msk [vmem:[#allocation3 + $0x8] sm:$0xff] %vm848, %v1800
        %1809 = vst.msk [vmem:[#allocation3 + $0x10] sm:$0xff] %vm848, %v1801
        %1810 = vst.msk [vmem:[#allocation3 + $0x18] sm:$0xff] %vm848, %v1802
        %1811 = vst.msk [vmem:[#allocation3 + $0x20] sm:$0xff] %vm848, %v1803
        %1812 = vst.msk [vmem:[#allocation3 + $0x28] sm:$0xff] %vm848, %v1804
        %1813 = vst.msk [vmem:[#allocation3 + $0x30] sm:$0xff] %vm848, %v1805
        %1814 = vst.msk [vmem:[#allocation3 + $0x38] sm:$0xff] %vm848, %v1806
        %p1815 = scmp.eq.s32.totalorder %s51, 3
        // Predicated region
        $region133: #{diffwave_forward.1} parent=75 // pred_check
          %p1816 = pneg %p1815
        $region134: #{diffwave_forward.1} parent=75 // pred_check_branch
          %1818 = sbr.rel (%p1816) target = $region136
        $region135: #{diffwave_forward.1} parent=75 // pred_region
          %v1819 = vld [vmem:[#allocation3] sm:$0xff]
          %v1820 = vld [vmem:[#allocation3 + $0x8] sm:$0xff]
          %v1821 = vld [vmem:[#allocation3 + $0x10] sm:$0xff]
          %v1822 = vld [vmem:[#allocation3 + $0x18] sm:$0xff]
          %v1823 = vld [vmem:[#allocation3 + $0x20] sm:$0xff]
          %v1824 = vld [vmem:[#allocation3 + $0x28] sm:$0xff]
          %v1825 = vld [vmem:[#allocation3 + $0x30] sm:$0xff]
          %v1826 = vld [vmem:[#allocation3 + $0x38] sm:$0xff]
          %v1827 = vmul.f32 %v1819, 0.25
          %v1828 = vmul.f32 %v1820, 0.25
          %v1829 = vmul.f32 %v1821, 0.25
          %v1830 = vmul.f32 %v1822, 0.25
          %v1831 = vmul.f32 %v1823, 0.25
          %v1832 = vmul.f32 %v1824, 0.25
          %v1833 = vmul.f32 %v1825, 0.25
          %v1834 = vmul.f32 %v1826, 0.25
          %v1835 = vmax.f32 %v1827, 0.0
          %v1836 = vmax.f32 %v1828, 0.0
          %v1837 = vmax.f32 %v1829, 0.0
          %v1838 = vmax.f32 %v1830, 0.0
          %v1839 = vmax.f32 %v1831, 0.0
          %v1840 = vmax.f32 %v1832, 0.0
          %v1841 = vmax.f32 %v1833, 0.0
          %v1842 = vmax.f32 %v1834, 0.0
          %v1843 = vld [vmem:[#allocation28] sm:$0x1]
          %v1844 = vld [vmem:[#allocation7] sm:$0x1]
          %1846 = vset.pattern.permute.xlu0 0
          %1847 = vperm.xlu0 %1846, %v1844
          %v1848 = vpop.permute.xlu0 %1847
          %v1850 = vlaneseq
          %v1851 = vshrl.u32 %v1850, 7
          %v1852 = vsub.s32 0, %v1851
          %v1853 = vrot.slane %v1848, %v1852
          %v1855 = vsel %vm848, %v1843, 0
          %v1858 = vsel %vm848, %v1835, 0
          %v1861 = vsel %vm848, %v1836, 0
          %v1864 = vsel %vm848, %v1837, 0
          %v1867 = vsel %vm848, %v1838, 0
          %v1870 = vsel %vm848, %v1839, 0
          %v1873 = vsel %vm848, %v1840, 0
          %v1876 = vsel %vm848, %v1841, 0
          %v1879 = vsel %vm848, %v1842, 0
          %1881 = vmatprep.subr.mxu0 0.0
          %1882 = vmatpush1.xpose.msra.mxu0 %v1858
          %1883 = vmatprep.subr.mxu0 0.0
          %1884 = vmatpush1.xpose.msra.mxu0 %v1861
          %1885 = vmatprep.subr.mxu0 0.0
          %1886 = vmatpush1.xpose.msra.mxu0 %v1864
          %1887 = vmatprep.subr.mxu0 0.0
          %1888 = vmatpush1.xpose.msra.mxu0 %v1867
          %1889 = vmatprep.subr.mxu0 0.0
          %1890 = vmatpush1.xpose.msra.mxu0 %v1870
          %1891 = vmatprep.subr.mxu0 0.0
          %1892 = vmatpush1.xpose.msra.mxu0 %v1873
          %1893 = vmatprep.subr.mxu0 0.0
          %1894 = vmatpush1.xpose.msra.mxu0 %v1876
          %1895 = vmatprep.subr.mxu0 0.0
          %1896 = vmatpush1.xpose.msra.mxu0 %v1879
          %1897 = vmatprep.subr.mxu0 0.0
          %1898 = vmatpush1.xpose.msra.mxu0 0.0
          %1899 = vmatprep.subr.mxu0 0.0
          %1900 = vmatpush1.xpose.msra.mxu0 0.0
          %1901 = vmatprep.subr.mxu0 0.0
          %1902 = vmatpush1.xpose.msra.mxu0 0.0
          %1903 = vmatprep.subr.mxu0 0.0
          %1904 = vmatpush1.xpose.msra.mxu0 0.0
          %1905 = vmatprep.subr.mxu0 0.0
          %1906 = vmatpush1.xpose.msra.mxu0 0.0
          %1907 = vmatprep.subr.mxu0 0.0
          %1908 = vmatpush1.xpose.msra.mxu0 0.0
          %1909 = vmatprep.subr.mxu0 0.0
          %1910 = vmatpush1.xpose.msra.mxu0 0.0
          %1911 = vmatprep.subr.mxu0 0.0
          %1912 = vmatpush1.xpose.msra.mxu0 0.0
          %1913 = vmatprep.subr.mxu0 0.0
          %1914 = vmatpush1.xpose.msra.mxu0 0.0
          %1915 = vmatprep.subr.mxu0 0.0
          %1916 = vmatpush1.xpose.msra.mxu0 0.0
          %1917 = vmatprep.subr.mxu0 0.0
          %1918 = vmatpush1.xpose.msra.mxu0 0.0
          %1919 = vmatprep.subr.mxu0 0.0
          %1920 = vmatpush1.xpose.msra.mxu0 0.0
          %1921 = vmatprep.subr.mxu0 0.0
          %1922 = vmatpush1.xpose.msra.mxu0 0.0
          %1923 = vmatprep.subr.mxu0 0.0
          %1924 = vmatpush1.xpose.msra.mxu0 0.0
          %1925 = vmatprep.subr.mxu0 0.0
          %1926 = vmatpush1.xpose.msra.mxu0 0.0
          %1927 = vmatprep.subr.mxu0 0.0
          %1928 = vmatpush1.xpose.msra.mxu0 0.0
          %1929 = vmatprep.subr.mxu0 0.0
          %1930 = vmatpush1.xpose.msra.mxu0 0.0
          %1931 = vmatprep.subr.mxu0 0.0
          %1932 = vmatpush1.xpose.msra.mxu0 0.0
          %1933 = vmatprep.subr.mxu0 0.0
          %1934 = vmatpush1.xpose.msra.mxu0 0.0
          %1935 = vmatprep.subr.mxu0 0.0
          %1936 = vmatpush1.xpose.msra.mxu0 0.0
          %1937 = vmatprep.subr.mxu0 0.0
          %1938 = vmatpush1.xpose.msra.mxu0 0.0
          %1939 = vmatprep.subr.mxu0 0.0
          %1940 = vmatpush1.xpose.msra.mxu0 0.0
          %1941 = vmatprep.subr.mxu0 0.0
          %1942 = vmatpush1.xpose.msra.mxu0 0.0
          %1943 = vmatprep.subr.mxu0 0.0
          %1944 = vmatpush1.xpose.msra.mxu0 0.0
          %1945 = vmatprep.mubr.f32.mxu0 0.0
          %1946 = vmatmul.mubr.f32.gmra.mrb[0].mxu0 %v1855
          %v1947 = vpop.f32.mrb[0].mxu0
          %v1948 = vadd.f32 %v1853, %v1947
          %v1949 = vpop.f32.mrb[0].mxu0
          %1950 = vdwg.mxu0
          %vm1951 = vcmask 516096
          %1952 = vst.msk [vmem:[%s695] sm:$0x1] %vm1951, %v1948
        $region136: #{diffwave_forward.1} parent=75 // pred_fallthru
          _
        %s1953 = sand.u32 %s370, 1
        %s1954 = scalar_lea.sflag [#allocation10], %s1953
        %s1955 = sand.u32 %s370, 1
        %s1956 = scalar_lea.vmem [#allocation29], %s1955
        // Predicated region
        $region137: #{diffwave_forward.1} parent=75 // pred_check
          %p1957 = pneg %p380
        $region138: #{diffwave_forward.1} parent=75 // pred_check_branch
          %1959 = sbr.rel (%p1957) target = $region140
        $region139: #{diffwave_forward.1} parent=75 // pred_region
          %s1961 = ssub.s32 16, 16
          %1962 = vsyncadd %s1954, %s1961
          %s1963 = smul.addr %s50, 16
          %s1964 = scalar_lea.hbm %s15, %s1963
          %s1966 = sshll.u32 %s1956, 4
          %s1967 = int_to_ptr.vmem [resolvable:$true] %s1966
          %1969 = dma.vmem_to_hbm [thread:$0]  %s1967, 16, %s1964, %s1954
        $region140: #{diffwave_forward.1} parent=75 // pred_fallthru
          _
      $region76: #{diffwave_forward.1} parent=5 // pred_fallthru
        _
      %p1970 = scmp.le.s32.totalorder 2, %s41
      // Predicated region
      $region141: #{diffwave_forward.1} parent=5 // pred_check
        %p1971 = pneg %p1970
      $region142: #{diffwave_forward.1} parent=5 // pred_check_branch
        %1973 = sbr.rel (%p1971) target = $region144
      $region143: #{diffwave_forward.1} parent=5 // pred_region
        %s1974 = ssub.s32 %s41, 2
        // Predicated region
        $region145: #{diffwave_forward.1} parent=143 // pred_check
          %p1975 = pneg %p386
        $region146: #{diffwave_forward.1} parent=143 // pred_check_branch
          %1977 = sbr.rel (%p1975) target = $region148
        $region147: #{diffwave_forward.1} parent=143 // pred_region
          %s1978 = sand.u32 %s371, 1
          %s1979 = scalar_lea.sflag [#allocation10], %s1978
          %s1980 = sand.u32 %s371, 1
          %s1981 = scalar_lea.vmem [#allocation29], %s1980
          %1982 = dma.done %s1979, 16
        $region148: #{diffwave_forward.1} parent=143 // pred_fallthru
          _
      $region144: #{diffwave_forward.1} parent=5 // pred_fallthru
        _
    $region6: #{diffwave_forward.1} parent=1 // loop_footer
      %s45 = sadd.s32 1, %s41
    $region7: #{diffwave_forward.1} parent=1 // loop_footer_branch
      %40 = sbr.rel target = $region3
    $region8: #{diffwave_forward.1} parent=1 // loop_exit
      _
    %1983 = vsyncpa [#allocation9], 1
    %s1984 = scalar_lea.sflag [#allocation9], 1
    %1985 = vsyncpa %s1984, 1
    %1986 = vsyncpa [#allocation12], 1
    %1987 = vsyncpa [#allocation15], 1
    %s1988 = scalar_lea.sflag [#allocation15], 1
    %1989 = vsyncpa %s1988, 1
    %1990 = vsyncpa [#allocation18], 1
    %1991 = vsyncpa [#allocation21], 1
    %1992 = vsyncpa [#allocation24], 1
    %1993 = vsyncpa [#allocation27], 1
    %1994 = vsyncpa [#allocation10], 1
    %s1995 = scalar_lea.sflag [#allocation10], 1
    %1996 = vsyncpa %s1995, 1

</llo_original>
